<compile_context>
chip_gen: v5e
topology: v5e:2x2
jax: 0.10.0
libtpu: 0.0.40
codegen_flags: <defaults>
</compile_context>

<pallas_src>
import functools
import math

import jax
import jax.numpy as jnp
from jax.experimental import pallas as pl
from jax.experimental.pallas import tpu as pltpu


def _attention_kernel(x_ref, qkvw_ref, qkvb_ref, pw_ref, pb_ref, o_ref, *,
                      scale, head_dim, heads_per_step):
    """One (batch-block b, head-group g) grid step."""
    g = pl.program_id(1)
    Bb, T, D = x_ref.shape
    hd = head_dim
    Hg = heads_per_step

    # ---- fused per-group q/k/v projection: one MXU pass, N = Hg*3*hd ---------
    xf = x_ref[...].reshape(Bb * T, D)                       # bf16, free reshape
    qkv = (jnp.dot(xf, qkvw_ref[0], preferred_element_type=jnp.float32)
           + qkvb_ref[0])                                    # (Bb*T, Hg*3*hd) f32

    # ---- per-head attention (static unroll over the Hg heads of this group) --
    wa_heads = []
    for hh in range(Hg):
        base = hh * 3 * hd
        # 1/sqrt(hd) folded into q (Bb*T*hd mults, not Bb*T*T per head).
        q = (qkv[:, base:base + hd] * scale).reshape(Bb, T, hd).astype(jnp.bfloat16)
        k = qkv[:, base + hd:base + 2 * hd].reshape(Bb, T, hd).astype(jnp.bfloat16)
        v = qkv[:, base + 2 * hd:base + 3 * hd].reshape(Bb, T, hd).astype(jnp.bfloat16)

        # Scores contract head_dim of both operands (k consumed untransposed).
        s = jnp.einsum('bqd,bkd->bqk', q, k,
                       preferred_element_type=jnp.float32)   # (Bb, T, T) f32
        s = s - jnp.max(s, axis=-1, keepdims=True)
        p = jnp.exp(s)
        p = p * pl.reciprocal(jnp.sum(p, axis=-1, keepdims=True), approx=True)
        # attn_drop is identity at attn_p = 0.0 (eval); intentionally omitted.

        wa = jnp.einsum('bqk,bkd->bqd', p.astype(jnp.bfloat16), v,
                        preferred_element_type=jnp.float32)  # (Bb, T, hd) f32
        wa_heads.append(wa.reshape(Bb * T, hd).astype(jnp.bfloat16))

    wa_grp = wa_heads[0] if Hg == 1 else jnp.concatenate(wa_heads, axis=-1)

    # ---- output projection contribution of this head group (K = Hg*hd) -------
    contrib = jnp.dot(wa_grp, pw_ref[0],
                      preferred_element_type=jnp.float32)    # (Bb*T, D) f32
    contrib = contrib.reshape(Bb, T, D)

    # Accumulate straight into the resident output block (its index map ignores
    # g, so the block stays in VMEM across the whole head-group axis).
    @pl.when(g == 0)
    def _init():
        o_ref[...] = jnp.zeros_like(o_ref)

    o_ref[...] += contrib

    @pl.when(g == pl.num_programs(1) - 1)
    def _finalize():
        # proj_drop is identity at proj_p = 0.0 (eval); intentionally omitted.
        o_ref[...] += pb_ref[...]


def _default_heads_per_step(n_heads, head_dim):
    """Largest divisor of n_heads whose group weight blocks are <= ~256 lanes
    per head slab (i.e. Hg*hd targets >= 256-wide MXU pushes on v6e/v7x)."""
    want = max(1, 256 // head_dim)
    return max(d for d in range(1, n_heads + 1) if n_heads % d == 0 and d <= want)


def _default_batch_block(B, T):
    """Largest divisor of B that keeps Bb*T rows modest, but leaves >=2 batch
    blocks when possible (the 'parallel' axis shards across v7x's 2 TCs)."""
    divisors = [d for d in range(1, B + 1) if B % d == 0]
    fits = [d for d in divisors if d * T <= 512]
    bb = max(fits) if fits else 1
    if bb == B and B > 1:
        bb = max(d for d in divisors if d < B)
    return bb


def attention(x, qkv_w, qkv_b, proj_w, proj_b, *, n_heads,
              heads_per_step=None, batch_block=None):
    """x: (B, T, D).  qkv_w: (D, 3D), qkv_b: (1, 3D), proj_w: (D, D),
       proj_b: (1, D) -- weights pre-transposed to (in_features, out_features)."""
    B, T, D = x.shape
    assert D % n_heads == 0
    hd = D // n_heads
    Hg = heads_per_step if heads_per_step is not None else _default_heads_per_step(n_heads, hd)
    Bb = batch_block if batch_block is not None else _default_batch_block(B, T)
    assert n_heads % Hg == 0 and B % Bb == 0
    G = n_heads // Hg

    # ---- host-side repack (plain XLA ops, outside the kernel) ---------------
    # Fused qkv weights, head-group major: within a group the columns are
    # [h0: q|k|v, h1: q|k|v, ...], each q/k/v slab hd wide (torch col = j*D + h*hd + d).
    w = qkv_w.reshape(D, 3, n_heads, hd)
    w = jnp.transpose(w, (2, 0, 1, 3))                      # (H, D, 3, hd)
    w = w.reshape(G, Hg, D, 3 * hd)
    qkv_w_g = jnp.transpose(w, (0, 2, 1, 3)).reshape(G, D, Hg * 3 * hd)
    qkv_w_g = qkv_w_g.astype(jnp.bfloat16)

    b = qkv_b.reshape(3, n_heads, hd)
    qkv_b_g = jnp.transpose(b, (1, 0, 2)).reshape(G, 1, Hg * 3 * hd).astype(jnp.float32)

    # Proj weight rows are head-major (h*hd + d_in): group them to (G, Hg*hd, D).
    proj_w_g = proj_w.reshape(G, Hg * hd, D).astype(jnp.bfloat16)
    proj_b_f = proj_b.astype(jnp.float32)

    x_bf = x.astype(jnp.bfloat16)                           # cast once in the wrapper

    kernel = functools.partial(_attention_kernel, scale=1.0 / math.sqrt(hd),
                               head_dim=hd, heads_per_step=Hg)

    return pl.pallas_call(
        kernel,
        out_shape=jax.ShapeDtypeStruct((B, T, D), jnp.float32),
        grid=(B // Bb, G),
        in_specs=[
            pl.BlockSpec((Bb, T, D), lambda bi, g: (bi, 0, 0)),           # x block
            pl.BlockSpec((1, D, Hg * 3 * hd), lambda bi, g: (g, 0, 0)),   # fused qkv W (group g)
            pl.BlockSpec((1, 1, Hg * 3 * hd), lambda bi, g: (g, 0, 0)),   # fused qkv bias
            pl.BlockSpec((1, Hg * hd, D), lambda bi, g: (g, 0, 0)),       # proj W rows (group g)
            pl.BlockSpec((1, D), lambda bi, g: (0, 0)),                   # proj bias
        ],
        out_specs=pl.BlockSpec((Bb, T, D), lambda bi, g: (bi, 0, 0)),
        compiler_params=pltpu.CompilerParams(
            dimension_semantics=("parallel", "arbitrary"),   # batch ||, head groups = reduction
            vmem_limit_bytes=32 * 1024 * 1024,               # below v7x's 64 MiB physical VMEM
        ),
    )(x_bf, qkv_w_g, qkv_b_g, proj_w_g, proj_b_f)


# ----------------------------------------------------------------- pure-JAX reference

def attention_ref(x, qkv_w, qkv_b, proj_w, proj_b, *, n_heads):
    """Literal transcription of the torch forward (f32)."""
    B, T, D = x.shape
    hd = D // n_heads
    qkv = x @ qkv_w + qkv_b                                    # (B, T, 3D)
    qkv = qkv.reshape(B, T, 3, n_heads, hd).transpose(2, 0, 3, 1, 4)
    q, k, v = qkv[0], qkv[1], qkv[2]                           # (B, H, T, hd)
    dp = (q @ jnp.swapaxes(k, -2, -1)) * (hd ** -0.5)
    attn = jax.nn.softmax(dp, axis=-1)
    wa = (attn @ v).transpose(0, 2, 1, 3).reshape(B, T, D)     # head-major flatten(2)
    return wa @ proj_w + proj_b


if __name__ == "__main__":
    # Small but TPU-friendly ViT-ish shapes: T = n_patches + 1 = 8, dim = 256,
    # n_heads = 2 -> head_dim = 128.  Defaults pick Bb = 2 (two parallel batch
    # blocks) and Hg = 2 (one head group, 768-wide fused qkv weight block).
    B, T, D, HEADS = 4, 8, 256, 2

    key = jax.random.PRNGKey(0)
    kx, k1, k2, k3, k4 = jax.random.split(key, 5)
    x = jax.random.normal(kx, (B, T, D), jnp.float32)
    qkv_w = 0.02 * jax.random.normal(k1, (D, 3 * D), jnp.float32)
    qkv_b = 0.02 * jax.random.normal(k2, (1, 3 * D), jnp.float32)
    proj_w = 0.02 * jax.random.normal(k3, (D, D), jnp.float32)
    proj_b = 0.02 * jax.random.normal(k4, (1, D), jnp.float32)

    out = jax.block_until_ready(
        attention(x, qkv_w, qkv_b, proj_w, proj_b, n_heads=HEADS))

    # Reference with the same bf16-rounded weights (kernel feeds bf16 to the MXU).
    ref = attention_ref(x,
                        qkv_w.astype(jnp.bfloat16).astype(jnp.float32), qkv_b,
                        proj_w.astype(jnp.bfloat16).astype(jnp.float32), proj_b,
                        n_heads=HEADS)

    assert out.shape == (B, T, D)
    assert bool(jnp.all(jnp.isfinite(out)))
    max_err = float(jnp.max(jnp.abs(out - ref)))
    assert max_err < 5e-2, f"max abs err vs reference: {max_err}"
    print("KERNEL_OK")
</pallas_src>

<mosaic_0001>
module attributes {stable_mosaic.version = 11 : i64} {
  func.func @_attention_kernel(%arg0: i32, %arg1: i32, %arg2: memref<2x8x256xbf16, #tpu.memory_space<vmem>>, %arg3: memref<1x256x768xbf16, #tpu.memory_space<vmem>>, %arg4: memref<1x1x768xf32, #tpu.memory_space<vmem>>, %arg5: memref<1x256x256xbf16, #tpu.memory_space<vmem>>, %arg6: memref<1x256xf32, #tpu.memory_space<vmem>>, %arg7: memref<2x8x256xf32, #tpu.memory_space<vmem>>) attributes {dimension_semantics = [#tpu.dimension_semantics<parallel>, #tpu.dimension_semantics<arbitrary>], iteration_bounds = array<i64: 2, 1>, scalar_prefetch = 0 : i64, scratch_operands = 0 : i64, tpu.core_type = #tpu.core_type<tc>, window_params = [{transform_indices = @transform_0, window_bounds = array<i64: 2, 8, 256>}, {transform_indices = @transform_1, window_bounds = array<i64: 1, 256, 768>}, {transform_indices = @transform_2, window_bounds = array<i64: 1, 1, 768>}, {transform_indices = @transform_3, window_bounds = array<i64: 1, 256, 256>}, {pipeline_mode = #tpu.pipeline_mode<synchronous>, transform_indices = @transform_4, window_bounds = array<i64: 1, 256>}, {transform_indices = @transform_5, window_bounds = array<i64: 2, 8, 256>}]} {
    %c0 = arith.constant 0 : index
    %c0_0 = arith.constant 0 : index
    %c0_1 = arith.constant 0 : index
    %0 = vector.load %arg2[%c0, %c0_0, %c0_1] : memref<2x8x256xbf16, #tpu.memory_space<vmem>>, vector<2x8x256xbf16>
    %1 = vector.shape_cast %0 : vector<2x8x256xbf16> to vector<16x256xbf16>
    %c0_2 = arith.constant 0 : index
    %c0_3 = arith.constant 0 : index
    %c0_4 = arith.constant 0 : index
    %2 = vector.load %arg3[%c0_2, %c0_3, %c0_4] : memref<1x256x768xbf16, #tpu.memory_space<vmem>>, vector<1x256x768xbf16>
    %3 = vector.shape_cast %2 : vector<1x256x768xbf16> to vector<256x768xbf16>
    %cst = arith.constant dense<0.000000e+00> : vector<16x768xf32>
    %4 = tpu.matmul %1, %3, %cst {dimension_numbers = #tpu.dot_dimension_numbers<[1], [0], [0], [1], [0, 0, 1, 1], [], []>} : vector<16x256xbf16>, vector<256x768xbf16>, vector<16x768xf32> -> vector<16x768xf32>
    %c0_5 = arith.constant 0 : index
    %c0_6 = arith.constant 0 : index
    %c0_7 = arith.constant 0 : index
    %5 = vector.load %arg4[%c0_5, %c0_6, %c0_7] : memref<1x1x768xf32, #tpu.memory_space<vmem>>, vector<1x1x768xf32>
    %6 = vector.shape_cast %5 : vector<1x1x768xf32> to vector<1x768xf32>
    %7 = vector.broadcast %6 : vector<1x768xf32> to vector<16x768xf32>
    %8 = arith.addf %4, %7 : vector<16x768xf32>
    %9 = vector.extract_strided_slice %8 {offsets = [0, 0], sizes = [16, 128], strides = [1, 1]} : vector<16x768xf32> to vector<16x128xf32>
    %cst_8 = arith.constant 0.0883883461 : f32
    %10 = vector.broadcast %cst_8 : f32 to vector<16x128xf32>
    %11 = arith.mulf %9, %10 : vector<16x128xf32>
    %12 = vector.shape_cast %11 : vector<16x128xf32> to vector<2x8x128xf32>
    %13 = arith.truncf %12 : vector<2x8x128xf32> to vector<2x8x128xbf16>
    %14 = vector.extract_strided_slice %8 {offsets = [0, 128], sizes = [16, 128], strides = [1, 1]} : vector<16x768xf32> to vector<16x128xf32>
    %15 = vector.shape_cast %14 : vector<16x128xf32> to vector<2x8x128xf32>
    %16 = arith.truncf %15 : vector<2x8x128xf32> to vector<2x8x128xbf16>
    %17 = vector.extract_strided_slice %8 {offsets = [0, 256], sizes = [16, 128], strides = [1, 1]} : vector<16x768xf32> to vector<16x128xf32>
    %18 = vector.shape_cast %17 : vector<16x128xf32> to vector<2x8x128xf32>
    %19 = arith.truncf %18 : vector<2x8x128xf32> to vector<2x8x128xbf16>
    "tpu.trace_start"() <{level = 10 : i32, message = "bqd,bkd->bqk"}> : () -> ()
    %cst_9 = arith.constant dense<0.000000e+00> : vector<2x8x8xf32>
    %20 = tpu.matmul %13, %16, %cst_9 {dimension_numbers = #tpu.dot_dimension_numbers<[2], [2], [1], [1], [0, 0, 0, 1, 1, 1], [0], [0]>} : vector<2x8x128xbf16>, vector<2x8x128xbf16>, vector<2x8x8xf32> -> vector<2x8x8xf32>
    "tpu.trace_stop"() : () -> ()
    %cst_10 = arith.constant dense<0xFF800000> : vector<2x8xf32>
    %21 = vector.multi_reduction <maximumf>, %20, %cst_10 [2] : vector<2x8x8xf32> to vector<2x8xf32>
    %22 = vector.shape_cast %21 : vector<2x8xf32> to vector<2x8x1xf32>
    %23 = vector.broadcast %22 : vector<2x8x1xf32> to vector<2x8x8xf32>
    %24 = arith.subf %20, %23 : vector<2x8x8xf32>
    %25 = math.exp %24 : vector<2x8x8xf32>
    %cst_11 = arith.constant dense<0.000000e+00> : vector<2x8xf32>
    %26 = vector.multi_reduction <add>, %25, %cst_11 [2] : vector<2x8x8xf32> to vector<2x8xf32>
    %27 = vector.shape_cast %26 : vector<2x8xf32> to vector<2x8x1xf32>
    %28 = tpu.reciprocal %27 {approx = true} : vector<2x8x1xf32> -> vector<2x8x1xf32>
    %29 = vector.broadcast %28 : vector<2x8x1xf32> to vector<2x8x8xf32>
    %30 = arith.mulf %25, %29 : vector<2x8x8xf32>
    %31 = arith.truncf %30 : vector<2x8x8xf32> to vector<2x8x8xbf16>
    "tpu.trace_start"() <{level = 10 : i32, message = "bqk,bkd->bqd"}> : () -> ()
    %cst_12 = arith.constant dense<0.000000e+00> : vector<2x8x128xf32>
    %32 = tpu.matmul %31, %19, %cst_12 {dimension_numbers = #tpu.dot_dimension_numbers<[2], [1], [1], [2], [0, 0, 0, 1, 1, 2], [0], [0]>} : vector<2x8x8xbf16>, vector<2x8x128xbf16>, vector<2x8x128xf32> -> vector<2x8x128xf32>
    "tpu.trace_stop"() : () -> ()
    %33 = vector.shape_cast %32 : vector<2x8x128xf32> to vector<16x128xf32>
    %34 = arith.truncf %33 : vector<16x128xf32> to vector<16x128xbf16>
    %35 = vector.extract_strided_slice %8 {offsets = [0, 384], sizes = [16, 128], strides = [1, 1]} : vector<16x768xf32> to vector<16x128xf32>
    %cst_13 = arith.constant 0.0883883461 : f32
    %36 = vector.broadcast %cst_13 : f32 to vector<16x128xf32>
    %37 = arith.mulf %35, %36 : vector<16x128xf32>
    %38 = vector.shape_cast %37 : vector<16x128xf32> to vector<2x8x128xf32>
    %39 = arith.truncf %38 : vector<2x8x128xf32> to vector<2x8x128xbf16>
    %40 = vector.extract_strided_slice %8 {offsets = [0, 512], sizes = [16, 128], strides = [1, 1]} : vector<16x768xf32> to vector<16x128xf32>
    %41 = vector.shape_cast %40 : vector<16x128xf32> to vector<2x8x128xf32>
    %42 = arith.truncf %41 : vector<2x8x128xf32> to vector<2x8x128xbf16>
    %43 = vector.extract_strided_slice %8 {offsets = [0, 640], sizes = [16, 128], strides = [1, 1]} : vector<16x768xf32> to vector<16x128xf32>
    %44 = vector.shape_cast %43 : vector<16x128xf32> to vector<2x8x128xf32>
    %45 = arith.truncf %44 : vector<2x8x128xf32> to vector<2x8x128xbf16>
    "tpu.trace_start"() <{level = 10 : i32, message = "bqd,bkd->bqk"}> : () -> ()
    %cst_14 = arith.constant dense<0.000000e+00> : vector<2x8x8xf32>
    %46 = tpu.matmul %39, %42, %cst_14 {dimension_numbers = #tpu.dot_dimension_numbers<[2], [2], [1], [1], [0, 0, 0, 1, 1, 1], [0], [0]>} : vector<2x8x128xbf16>, vector<2x8x128xbf16>, vector<2x8x8xf32> -> vector<2x8x8xf32>
    "tpu.trace_stop"() : () -> ()
    %cst_15 = arith.constant dense<0xFF800000> : vector<2x8xf32>
    %47 = vector.multi_reduction <maximumf>, %46, %cst_15 [2] : vector<2x8x8xf32> to vector<2x8xf32>
    %48 = vector.shape_cast %47 : vector<2x8xf32> to vector<2x8x1xf32>
    %49 = vector.broadcast %48 : vector<2x8x1xf32> to vector<2x8x8xf32>
    %50 = arith.subf %46, %49 : vector<2x8x8xf32>
    %51 = math.exp %50 : vector<2x8x8xf32>
    %cst_16 = arith.constant dense<0.000000e+00> : vector<2x8xf32>
    %52 = vector.multi_reduction <add>, %51, %cst_16 [2] : vector<2x8x8xf32> to vector<2x8xf32>
    %53 = vector.shape_cast %52 : vector<2x8xf32> to vector<2x8x1xf32>
    %54 = tpu.reciprocal %53 {approx = true} : vector<2x8x1xf32> -> vector<2x8x1xf32>
    %55 = vector.broadcast %54 : vector<2x8x1xf32> to vector<2x8x8xf32>
    %56 = arith.mulf %51, %55 : vector<2x8x8xf32>
    %57 = arith.truncf %56 : vector<2x8x8xf32> to vector<2x8x8xbf16>
    "tpu.trace_start"() <{level = 10 : i32, message = "bqk,bkd->bqd"}> : () -> ()
    %cst_17 = arith.constant dense<0.000000e+00> : vector<2x8x128xf32>
    %58 = tpu.matmul %57, %45, %cst_17 {dimension_numbers = #tpu.dot_dimension_numbers<[2], [1], [1], [2], [0, 0, 0, 1, 1, 2], [0], [0]>} : vector<2x8x8xbf16>, vector<2x8x128xbf16>, vector<2x8x128xf32> -> vector<2x8x128xf32>
    "tpu.trace_stop"() : () -> ()
    %59 = vector.shape_cast %58 : vector<2x8x128xf32> to vector<16x128xf32>
    %60 = arith.truncf %59 : vector<16x128xf32> to vector<16x128xbf16>
    %61 = tpu.concatenate %34, %60 in 1 : vector<16x128xbf16>, vector<16x128xbf16> -> vector<16x256xbf16>
    %c0_18 = arith.constant 0 : index
    %c0_19 = arith.constant 0 : index
    %c0_20 = arith.constant 0 : index
    %62 = vector.load %arg5[%c0_18, %c0_19, %c0_20] : memref<1x256x256xbf16, #tpu.memory_space<vmem>>, vector<1x256x256xbf16>
    %63 = vector.shape_cast %62 : vector<1x256x256xbf16> to vector<256x256xbf16>
    %cst_21 = arith.constant dense<0.000000e+00> : vector<16x256xf32>
    %64 = tpu.matmul %61, %63, %cst_21 {dimension_numbers = #tpu.dot_dimension_numbers<[1], [0], [0], [1], [0, 0, 1, 1], [], []>} : vector<16x256xbf16>, vector<256x256xbf16>, vector<16x256xf32> -> vector<16x256xf32>
    %65 = vector.shape_cast %64 : vector<16x256xf32> to vector<2x8x256xf32>
    %c0_i32 = arith.constant 0 : i32
    %66 = arith.cmpi eq, %arg1, %c0_i32 : i32
    %67 = arith.extui %66 : i1 to i32
    %c0_i32_22 = arith.constant 0 : i32
    %68 = arith.cmpi ne, %67, %c0_i32_22 : i32
    scf.if %68 {
      %cst_31 = arith.constant 0.000000e+00 : f32
      %75 = vector.broadcast %cst_31 : f32 to vector<2x8x256xf32>
      %c0_32 = arith.constant 0 : index
      %c0_33 = arith.constant 0 : index
      %c0_34 = arith.constant 0 : index
      %76 = vector.load %arg7[%c0_32, %c0_33, %c0_34] : memref<2x8x256xf32, #tpu.memory_space<vmem>>, vector<2x8x256xf32>
      tpu.vector_store %arg7[%c0_32, %c0_33, %c0_34], %75 {strides = array<i32>} : memref<2x8x256xf32, #tpu.memory_space<vmem>>, vector<2x8x256xf32>,
    } else {
    }
    %c0_23 = arith.constant 0 : index
    %c0_24 = arith.constant 0 : index
    %c0_25 = arith.constant 0 : index
    %69 = vector.load %arg7[%c0_23, %c0_24, %c0_25] : memref<2x8x256xf32, #tpu.memory_space<vmem>>, vector<2x8x256xf32>
    %70 = arith.addf %69, %65 : vector<2x8x256xf32>
    %c0_26 = arith.constant 0 : index
    %c0_27 = arith.constant 0 : index
    %c0_28 = arith.constant 0 : index
    %71 = vector.load %arg7[%c0_26, %c0_27, %c0_28] : memref<2x8x256xf32, #tpu.memory_space<vmem>>, vector<2x8x256xf32>
    tpu.vector_store %arg7[%c0_26, %c0_27, %c0_28], %70 {strides = array<i32>} : memref<2x8x256xf32, #tpu.memory_space<vmem>>, vector<2x8x256xf32>,
    %c0_i32_29 = arith.constant 0 : i32
    %72 = arith.cmpi eq, %arg1, %c0_i32_29 : i32
    %73 = arith.extui %72 : i1 to i32
    %c0_i32_30 = arith.constant 0 : i32
    %74 = arith.cmpi ne, %73, %c0_i32_30 : i32
    scf.if %74 {
      %c0_31 = arith.constant 0 : index
      %c0_32 = arith.constant 0 : index
      %c0_33 = arith.constant 0 : index
      %75 = vector.load %arg7[%c0_31, %c0_32, %c0_33] : memref<2x8x256xf32, #tpu.memory_space<vmem>>, vector<2x8x256xf32>
      %c0_34 = arith.constant 0 : index
      %c0_35 = arith.constant 0 : index
      %76 = vector.load %arg6[%c0_34, %c0_35] : memref<1x256xf32, #tpu.memory_space<vmem>>, vector<1x256xf32>
      %77 = vector.shape_cast %76 : vector<1x256xf32> to vector<1x1x256xf32>
      %78 = vector.broadcast %77 : vector<1x1x256xf32> to vector<2x8x256xf32>
      %79 = arith.addf %75, %78 : vector<2x8x256xf32>
      %c0_36 = arith.constant 0 : index
      %c0_37 = arith.constant 0 : index
      %c0_38 = arith.constant 0 : index
      %80 = vector.load %arg7[%c0_36, %c0_37, %c0_38] : memref<2x8x256xf32, #tpu.memory_space<vmem>>, vector<2x8x256xf32>
      tpu.vector_store %arg7[%c0_36, %c0_37, %c0_38], %79 {strides = array<i32>} : memref<2x8x256xf32, #tpu.memory_space<vmem>>, vector<2x8x256xf32>,
    } else {
    }
    return
  }
  func.func @transform_0(%arg0: i32, %arg1: i32) -> (i32, i32, i32) {
    %c0_i32 = arith.constant 0 : i32
    %c0_i32_0 = arith.constant 0 : i32
    %c0_i32_1 = arith.constant 0 : i32
    return %arg0, %c0_i32, %c0_i32_0 : i32, i32, i32
  }
  func.func @transform_1(%arg0: i32, %arg1: i32) -> (i32, i32, i32) {
    %c0_i32 = arith.constant 0 : i32
    %c0_i32_0 = arith.constant 0 : i32
    %c0_i32_1 = arith.constant 0 : i32
    return %arg1, %c0_i32, %c0_i32_0 : i32, i32, i32
  }
  func.func @transform_2(%arg0: i32, %arg1: i32) -> (i32, i32, i32) {
    %c0_i32 = arith.constant 0 : i32
    %c0_i32_0 = arith.constant 0 : i32
    %c0_i32_1 = arith.constant 0 : i32
    return %arg1, %c0_i32, %c0_i32_0 : i32, i32, i32
  }
  func.func @transform_3(%arg0: i32, %arg1: i32) -> (i32, i32, i32) {
    %c0_i32 = arith.constant 0 : i32
    %c0_i32_0 = arith.constant 0 : i32
    %c0_i32_1 = arith.constant 0 : i32
    return %arg1, %c0_i32, %c0_i32_0 : i32, i32, i32
  }
  func.func @transform_4(%arg0: i32, %arg1: i32) -> (i32, i32) {
    %c0_i32 = arith.constant 0 : i32
    %c0_i32_0 = arith.constant 0 : i32
    %c0_i32_1 = arith.constant 0 : i32
    return %c0_i32, %c0_i32_0 : i32, i32
  }
  func.func @transform_5(%arg0: i32, %arg1: i32) -> (i32, i32, i32) {
    %c0_i32 = arith.constant 0 : i32
    %c0_i32_0 = arith.constant 0 : i32
    %c0_i32_1 = arith.constant 0 : i32
    return %arg0, %c0_i32, %c0_i32_0 : i32, i32, i32
  }
}

</mosaic_0001>

<llo_original>
// kernel: tpu_custom_call.1
$region0: #{tpu_custom_call.1}
  #allocation0 [shape = 'u32[]', space=smem, size = 0x4, offset = 0x4, fixed_abs, tag = 'smem constant byte address 0x4 - core index']
  #allocation1 [shape = 'u32[72,128]{1,0:T(1,128)}', space=vmem, size = 0x9000, scoped, tag = 'internal scratch']
  %s0 = inlined_call_operand.hbm [shape: bf16[4,8,256], index: 0, kind: input, shape index: {}]
  %s1 = inlined_call_operand.hbm [shape: bf16[1,256,768], index: 1, kind: input, shape index: {}]
  %s2 = inlined_call_operand.hbm [shape: f32[1,1,768], index: 2, kind: input, shape index: {}]
  %s3 = inlined_call_operand.hbm [shape: bf16[1,256,256], index: 3, kind: input, shape index: {}]
  %s4 = inlined_call_operand.vmem [shape: f32[1,256], index: 4, kind: input, shape index: {}]
  %s5 = inlined_call_operand.hbm [shape: f32[4,8,256], index: 5, kind: output, shape index: {}]
  %s6 = sld [smem:[#allocation0]]
  $region77: #{tpu_custom_call.1} parent=0
    _
  %s8 = ssub.s32 1, %s6
  %s9 = scalar_select 0, %s8, %s6
  $region1: #{tpu_custom_call.1} parent=0
    #allocation2 [shape = 'u8[16384]{0}', space=vmem, size = 0x4000, scoped, tag = 'input window, operand 0']
    #allocation3 [shape = 's32[2]{0}', space=sflag, size = 0x8, scoped, tag = 'scoped memory for tpu_custom_call.1']
    #allocation4 [shape = 's32[2]{0}', space=sflag, size = 0x8, scoped, tag = 'scoped memory for tpu_custom_call.1']
    #allocation5 [shape = 'u8[393216]{0}', space=vmem, size = 0x60000, scoped, tag = 'input window, operand 1, single buffered']
    #allocation6 [shape = 's32[1]{0}', space=sflag, size = 0x4, scoped, tag = 'scoped memory for tpu_custom_call.1']
    #allocation7 [shape = 'u8[3072]{0}', space=vmem, size = 0xc00, scoped, tag = 'input window, operand 2, single buffered']
    #allocation8 [shape = 'u8[131072]{0}', space=vmem, size = 0x20000, scoped, tag = 'input window, operand 3, single buffered']
    #allocation9 [shape = 's32[1]{0}', space=sflag, size = 0x4, scoped, tag = 'scoped memory for tpu_custom_call.1']
    #allocation10 [shape = 'u8[32768]{0}', space=vmem, size = 0x8000, scoped, tag = 'output window, operand 0']
    %10 = vsyncpa [#allocation3], 0
    %s11 = scalar_lea.sflag [#allocation3], 1
    %12 = vsyncpa %s11, 0
    %13 = vsyncpa [#allocation6], 0
    %14 = vsyncpa [#allocation9], 0
    %15 = vsyncpa [#allocation4], 0
    %s16 = scalar_lea.sflag [#allocation4], 1
    %17 = vsyncpa %s16, 0
    loop: start=0, step=1, limit=4
    $region2: #{tpu_custom_call.1} parent=1 // loop_pre_header
      _
    $region3: #{tpu_custom_call.1} parent=1 // loop_header
      %s19 = sphi 0, %s23
      %p20 = scmp.ge.s32.totalorder %s19, 4
      %s26 = sphi 0, %s38
      %s27 = sphi 0, %s34
      %s28 = sphi 0, %s26
      %s29 = sphi 0, %s27
      %s30 = sphi 0, %s28
      %s31 = sphi 0, %s29
      %s41 = sphi 0, %s43
      %s44 = sphi 0, %s41
      %s45 = sphi 0, %s44
      %s61 = sphi 0, %s45
      %s67 = sphi 0, %s69
      %s70 = sphi 0, %s67
      %s71 = sphi 0, %s70
      %s87 = sphi 0, %s71
      %s93 = sphi 0, %s95
      %s96 = sphi 0, %s93
      %s97 = sphi 0, %s96
      %s113 = sphi 0, %s97
      %s119 = sphi 0, %s121
      %s122 = sphi 0, %s119
      %s123 = sphi 0, %s122
      %s139 = sphi 0, %s123
      %s143 = sphi 0, %s143
      %s145 = sphi 0, %s143
      %s146 = sphi 0, %s145
      %s160 = sphi 0, %s146
      %s166 = sphi 0, %s168
      %s169 = sphi 0, %s166
      %s170 = sphi 0, %s169
      %s186 = sphi 0, %s170
    $region4: #{tpu_custom_call.1} parent=1 // loop_header_branch
      %22 = sbr.rel (%p20) target = $region8
    $region5: #{tpu_custom_call.1} parent=1 // loop_body
      %s24 = ssub.s32 %s19, 1
      %s25 = ssub.s32 %s19, 2
      %s32 = sadd.s32 1, %s27
      %p33 = scmp.ge.s32.totalorder %s32, 1
      %s34 = scalar_select %p33, 0, %s32
      %s35 = sadd.s32 1, %s26
      %s36 = scalar_select %p33, %s35, %s26
      %p37 = scmp.ge.s32.totalorder %s36, 2
      %s38 = scalar_select %p37, 0, %s36
      %s39 = ssub.s32 %s26, %s38
      %p40 = scmp.eq.s32.totalorder %s39, 0
      %s42 = sadd.s32 %s41, 1
      %s43 = scalar_select %p40, %s41, %s42
      %p46 = pneg %p40
      %p47 = scmp.eq.s32.totalorder %s19, 1
      %p48 = por %p46, %p47
      %p49 = scmp.ne.s32.totalorder %s41, %s44
      %p50 = scmp.eq.s32.totalorder %s19, 0
      %p51 = por %p49, %p50
      %p52 = scmp.ne.s32.totalorder %s41, %s44
      %p53 = scmp.eq.s32.totalorder %s24, 1
      %p54 = por %p52, %p53
      %p55 = scmp.ne.s32.totalorder %s44, %s45
      %p56 = scmp.eq.s32.totalorder %s24, 0
      %p57 = por %p55, %p56
      %p58 = scmp.ne.s32.totalorder %s44, %s45
      %p59 = scmp.eq.s32.totalorder %s25, 1
      %p60 = por %p58, %p59
      %p62 = scmp.ne.s32.totalorder %s45, %s61
      %p63 = scmp.eq.s32.totalorder %s25, 0
      %p64 = por %p62, %p63
      %s65 = ssub.s32 %s27, %s34
      %p66 = scmp.eq.s32.totalorder %s65, 0
      %s68 = sadd.s32 %s67, 1
      %s69 = scalar_select %p66, %s67, %s68
      %p72 = pneg %p66
      %p73 = scmp.eq.s32.totalorder %s19, 1
      %p74 = por %p72, %p73
      %p75 = scmp.ne.s32.totalorder %s67, %s70
      %p76 = scmp.eq.s32.totalorder %s19, 0
      %p77 = por %p75, %p76
      %p78 = scmp.ne.s32.totalorder %s67, %s70
      %p79 = scmp.eq.s32.totalorder %s24, 1
      %p80 = por %p78, %p79
      %p81 = scmp.ne.s32.totalorder %s70, %s71
      %p82 = scmp.eq.s32.totalorder %s24, 0
      %p83 = por %p81, %p82
      %p84 = scmp.ne.s32.totalorder %s70, %s71
      %p85 = scmp.eq.s32.totalorder %s25, 1
      %p86 = por %p84, %p85
      %p88 = scmp.ne.s32.totalorder %s71, %s87
      %p89 = scmp.eq.s32.totalorder %s25, 0
      %p90 = por %p88, %p89
      %s91 = ssub.s32 %s27, %s34
      %p92 = scmp.eq.s32.totalorder %s91, 0
      %s94 = sadd.s32 %s93, 1
      %s95 = scalar_select %p92, %s93, %s94
      %p98 = pneg %p92
      %p99 = scmp.eq.s32.totalorder %s19, 1
      %p100 = por %p98, %p99
      %p101 = scmp.ne.s32.totalorder %s93, %s96
      %p102 = scmp.eq.s32.totalorder %s19, 0
      %p103 = por %p101, %p102
      %p104 = scmp.ne.s32.totalorder %s93, %s96
      %p105 = scmp.eq.s32.totalorder %s24, 1
      %p106 = por %p104, %p105
      %p107 = scmp.ne.s32.totalorder %s96, %s97
      %p108 = scmp.eq.s32.totalorder %s24, 0
      %p109 = por %p107, %p108
      %p110 = scmp.ne.s32.totalorder %s96, %s97
      %p111 = scmp.eq.s32.totalorder %s25, 1
      %p112 = por %p110, %p111
      %p114 = scmp.ne.s32.totalorder %s97, %s113
      %p115 = scmp.eq.s32.totalorder %s25, 0
      %p116 = por %p114, %p115
      %s117 = ssub.s32 %s27, %s34
      %p118 = scmp.eq.s32.totalorder %s117, 0
      %s120 = sadd.s32 %s119, 1
      %s121 = scalar_select %p118, %s119, %s120
      %p124 = pneg %p118
      %p125 = scmp.eq.s32.totalorder %s19, 1
      %p126 = por %p124, %p125
      %p127 = scmp.ne.s32.totalorder %s119, %s122
      %p128 = scmp.eq.s32.totalorder %s19, 0
      %p129 = por %p127, %p128
      %p130 = scmp.ne.s32.totalorder %s119, %s122
      %p131 = scmp.eq.s32.totalorder %s24, 1
      %p132 = por %p130, %p131
      %p133 = scmp.ne.s32.totalorder %s122, %s123
      %p134 = scmp.eq.s32.totalorder %s24, 0
      %p135 = por %p133, %p134
      %p136 = scmp.ne.s32.totalorder %s122, %s123
      %p137 = scmp.eq.s32.totalorder %s25, 1
      %p138 = por %p136, %p137
      %p140 = scmp.ne.s32.totalorder %s123, %s139
      %p141 = scmp.eq.s32.totalorder %s25, 0
      %p142 = por %p140, %p141
      %s144 = sadd.s32 %s143, 1
      %p147 = scmp.eq.s32.totalorder %s19, 1
      %p148 = scmp.ne.s32.totalorder %s143, %s145
      %p149 = scmp.eq.s32.totalorder %s19, 0
      %p150 = por %p148, %p149
      %p151 = scmp.ne.s32.totalorder %s143, %s145
      %p152 = scmp.eq.s32.totalorder %s24, 1
      %p153 = por %p151, %p152
      %p154 = scmp.ne.s32.totalorder %s145, %s146
      %p155 = scmp.eq.s32.totalorder %s24, 0
      %p156 = por %p154, %p155
      %p157 = scmp.ne.s32.totalorder %s145, %s146
      %p158 = scmp.eq.s32.totalorder %s25, 1
      %p159 = por %p157, %p158
      %p161 = scmp.ne.s32.totalorder %s146, %s160
      %p162 = scmp.eq.s32.totalorder %s25, 0
      %p163 = por %p161, %p162
      %s164 = ssub.s32 %s26, %s38
      %p165 = scmp.eq.s32.totalorder %s164, 0
      %s167 = sadd.s32 %s166, 1
      %s168 = scalar_select %p165, %s166, %s167
      %p171 = pneg %p165
      %p172 = scmp.eq.s32.totalorder %s19, 1
      %p173 = por %p171, %p172
      %p174 = scmp.ne.s32.totalorder %s166, %s169
      %p175 = scmp.eq.s32.totalorder %s19, 0
      %p176 = por %p174, %p175
      %p177 = scmp.ne.s32.totalorder %s166, %s169
      %p178 = scmp.eq.s32.totalorder %s24, 1
      %p179 = por %p177, %p178
      %p180 = scmp.ne.s32.totalorder %s169, %s170
      %p181 = scmp.eq.s32.totalorder %s24, 0
      %p182 = por %p180, %p181
      %p183 = scmp.ne.s32.totalorder %s169, %s170
      %p184 = scmp.eq.s32.totalorder %s25, 1
      %p185 = por %p183, %p184
      %p187 = scmp.ne.s32.totalorder %s170, %s186
      %p188 = scmp.eq.s32.totalorder %s25, 0
      %p189 = por %p187, %p188
      %p190 = scmp.le.s32.totalorder 1, %s19
      %p191 = scmp.lt.s32.totalorder %s19, 3
      %p192 = pnand %p190, %p191
      %p193 = pneg %p192
      // Predicated region
      $region9: #{tpu_custom_call.1} parent=5 // pred_check
        _
      $region10: #{tpu_custom_call.1} parent=5 // pred_check_branch
        %195 = sbr.rel (%p192) target = $region12
      $region11: #{tpu_custom_call.1} parent=5 // pred_region
        %s196 = ssub.s32 %s19, 1
        // Predicated region
        $region13: #{tpu_custom_call.1} parent=11 // pred_check
          %p197 = pneg %p83
        $region14: #{tpu_custom_call.1} parent=11 // pred_check_branch
          %199 = sbr.rel (%p197) target = $region16
        $region15: #{tpu_custom_call.1} parent=11 // pred_region
          %201 = vsyncadd [#allocation6], 0
          %s202 = smul.addr %s29, 192
          %s203 = smul.addr %s202, 4
          %s204 = scalar_lea.hbm %s1, %s203
          %s205 = sshll.u32 %s204, 4
          %s206 = int_to_ptr.hbm [resolvable:$true] %s205
          %s207 = sshll.u32 [#allocation5], 4
          %s208 = int_to_ptr.vmem [resolvable:$true] %s207
          %213 = dma.hbm_to_vmem [thread:$0]  %s206, 12288, %s208, [#allocation6], 384, 384, 24
        $region16: #{tpu_custom_call.1} parent=11 // pred_fallthru
          _
        // Predicated region
        $region17: #{tpu_custom_call.1} parent=11 // pred_check
          %p214 = pneg %p109
        $region18: #{tpu_custom_call.1} parent=11 // pred_check_branch
          %216 = sbr.rel (%p214) target = $region20
        $region19: #{tpu_custom_call.1} parent=11 // pred_region
          %218 = vsyncadd [#allocation6], 0
          %s219 = smul.addr %s29, 6
          %s220 = scalar_lea.hbm %s2, %s219
          %s222 = sshll.u32 %s220, 4
          %s223 = int_to_ptr.hbm [resolvable:$true] %s222
          %s224 = sshll.u32 [#allocation7], 4
          %s225 = int_to_ptr.vmem [resolvable:$true] %s224
          %227 = dma.hbm_to_vmem [thread:$0]  %s223, 96, %s225, [#allocation6]
        $region20: #{tpu_custom_call.1} parent=11 // pred_fallthru
          _
        // Predicated region
        $region21: #{tpu_custom_call.1} parent=11 // pred_check
          %p228 = pneg %p135
        $region22: #{tpu_custom_call.1} parent=11 // pred_check_branch
          %230 = sbr.rel (%p228) target = $region24
        $region23: #{tpu_custom_call.1} parent=11 // pred_region
          %232 = vsyncadd [#allocation9], 0
          %s233 = smul.addr %s29, 64
          %s234 = smul.addr %s233, 4
          %s235 = scalar_lea.hbm %s3, %s234
          %s236 = sshll.u32 %s235, 4
          %s237 = int_to_ptr.hbm [resolvable:$true] %s236
          %s238 = sshll.u32 [#allocation8], 4
          %s239 = int_to_ptr.vmem [resolvable:$true] %s238
          %244 = dma.hbm_to_vmem [thread:$0]  %s237, 4096, %s239, [#allocation9], 128, 128, 8
        $region24: #{tpu_custom_call.1} parent=11 // pred_fallthru
          _
        // Predicated region
        $region25: #{tpu_custom_call.1} parent=11 // pred_check
          %p245 = pneg %p156
        $region26: #{tpu_custom_call.1} parent=11 // pred_check_branch
          %247 = sbr.rel (%p245) target = $region28
        $region27: #{tpu_custom_call.1} parent=11 // pred_region
          _
        $region28: #{tpu_custom_call.1} parent=11 // pred_fallthru
          _
      $region12: #{tpu_custom_call.1} parent=5 // pred_fallthru
        _
      %p248 = scmp.lt.s32.totalorder %s19, 2
      // Predicated region
      $region29: #{tpu_custom_call.1} parent=5 // pred_check
        %p249 = pneg %p248
      $region30: #{tpu_custom_call.1} parent=5 // pred_check_branch
        %251 = sbr.rel (%p249) target = $region32
      $region31: #{tpu_custom_call.1} parent=5 // pred_region
        // Predicated region
        $region33: #{tpu_custom_call.1} parent=31 // pred_check
          %p252 = pneg %p51
        $region34: #{tpu_custom_call.1} parent=31 // pred_check_branch
          %254 = sbr.rel (%p252) target = $region36
        $region35: #{tpu_custom_call.1} parent=31 // pred_region
          %s255 = sand.u32 %s41, 1
          %s256 = scalar_lea.sflag [#allocation3], %s255
          %s257 = sand.u32 %s41, 1
          %s258 = smul.addr %s257, 16
          %s259 = scalar_lea.vmem [#allocation2], %s258
          %s260 = smul.u32 2, %s26
          %262 = vsyncadd %s256, 0
          %s263 = smul.addr %s260, 2
          %s264 = smul.addr %s263, 4
          %s265 = scalar_lea.hbm %s0, %s264
          %s266 = sshll.u32 %s265, 4
          %s267 = int_to_ptr.hbm [resolvable:$true] %s266
          %s268 = sshll.u32 %s259, 4
          %s269 = int_to_ptr.vmem [resolvable:$true] %s268
          %274 = dma.hbm_to_vmem [thread:$0]  %s267, 256, %s269, %s256, 128, 128, 8
        $region36: #{tpu_custom_call.1} parent=31 // pred_fallthru
          _
      $region32: #{tpu_custom_call.1} parent=5 // pred_fallthru
        _
      %p275 = scmp.le.s32.totalorder 1, %s19
      %p276 = scmp.lt.s32.totalorder %s19, 3
      %p277 = pnand %p275, %p276
      %p278 = pneg %p277
      // Predicated region
      $region37: #{tpu_custom_call.1} parent=5 // pred_check
        _
      $region38: #{tpu_custom_call.1} parent=5 // pred_check_branch
        %280 = sbr.rel (%p277) target = $region40
      $region39: #{tpu_custom_call.1} parent=5 // pred_region
        %s281 = ssub.s32 %s19, 1
        %s282 = sand.u32 %s44, 1
        %s283 = scalar_lea.sflag [#allocation3], %s282
        %s284 = sand.u32 %s44, 1
        %s285 = smul.addr %s284, 16
        %s286 = scalar_lea.vmem [#allocation2], %s285
        // Predicated region
        $region41: #{tpu_custom_call.1} parent=39 // pred_check
          %p287 = pneg %p57
        $region42: #{tpu_custom_call.1} parent=39 // pred_check_branch
          %289 = sbr.rel (%p287) target = $region44
        $region43: #{tpu_custom_call.1} parent=39 // pred_region
          %291 = dma.done %s283, 256
        $region44: #{tpu_custom_call.1} parent=39 // pred_fallthru
          _
        // Predicated region
        $region45: #{tpu_custom_call.1} parent=39 // pred_check
          %p292 = pneg %p83
        $region46: #{tpu_custom_call.1} parent=39 // pred_check_branch
          %294 = sbr.rel (%p292) target = $region48
        $region47: #{tpu_custom_call.1} parent=39 // pred_region
          %296 = dma.done [#allocation6], 12288
        $region48: #{tpu_custom_call.1} parent=39 // pred_fallthru
          _
        // Predicated region
        $region49: #{tpu_custom_call.1} parent=39 // pred_check
          %p297 = pneg %p109
        $region50: #{tpu_custom_call.1} parent=39 // pred_check_branch
          %299 = sbr.rel (%p297) target = $region52
        $region51: #{tpu_custom_call.1} parent=39 // pred_region
          %301 = dma.done [#allocation6], 96
        $region52: #{tpu_custom_call.1} parent=39 // pred_fallthru
          _
        // Predicated region
        $region53: #{tpu_custom_call.1} parent=39 // pred_check
          %p302 = pneg %p135
        $region54: #{tpu_custom_call.1} parent=39 // pred_check_branch
          %304 = sbr.rel (%p302) target = $region56
        $region55: #{tpu_custom_call.1} parent=39 // pred_region
          %306 = dma.done [#allocation9], 4096
        $region56: #{tpu_custom_call.1} parent=39 // pred_fallthru
          _
        %s307 = sand.u32 %s44, 1
        %s308 = scalar_lea.sflag [#allocation3], %s307
        %s309 = sand.u32 %s44, 1
        %s310 = smul.addr %s309, 16
        %s311 = scalar_lea.vmem [#allocation2], %s310
        %p312 = pneg %p57
        %p313 = pneg %p54
        %p314 = pneg %p83
        %p315 = pneg %p80
        %p316 = pneg %p109
        %p317 = pneg %p106
        %p318 = pneg %p135
        %p319 = pneg %p132
        %p320 = pneg %p156
        %p321 = pneg %p153
        %p322 = pneg %p182
        %p323 = pneg %p179
        %s324 = sand.u32 %s169, 1
        %s325 = scalar_lea.sflag [#allocation4], %s324
        %s326 = sand.u32 %s169, 1
        %s327 = smul.addr %s326, 32
        %s328 = scalar_lea.vmem [#allocation10], %s327
        %s329 = smul.u32 2, %s28
        %s330 = smul.u32 2, %s28
        %v332 = vld [vmem:[%s286] sm:$0xff]
        %v333 = vld [vmem:[%s286 + $0x8] sm:$0xff]
        %v334 = vld [vmem:[#allocation5] sm:$0xff]
        %v335 = vld [vmem:[#allocation5 + $0x8] sm:$0xff]
        %v336 = vld [vmem:[#allocation5 + $0x10] sm:$0xff]
        %v337 = vld [vmem:[#allocation5 + $0x18] sm:$0xff]
        %v338 = vld [vmem:[#allocation5 + $0x20] sm:$0xff]
        %v339 = vld [vmem:[#allocation5 + $0x28] sm:$0xff]
        %v340 = vld [vmem:[#allocation5 + $0x30] sm:$0xff]
        %v341 = vld [vmem:[#allocation5 + $0x38] sm:$0xff]
        %v342 = vld [vmem:[#allocation5 + $0x40] sm:$0xff]
        %v343 = vld [vmem:[#allocation5 + $0x48] sm:$0xff]
        %v344 = vld [vmem:[#allocation5 + $0x50] sm:$0xff]
        %v345 = vld [vmem:[#allocation5 + $0x58] sm:$0xff]
        %v346 = vld [vmem:[#allocation5 + $0x60] sm:$0xff]
        %v347 = vld [vmem:[#allocation5 + $0x68] sm:$0xff]
        %v348 = vld [vmem:[#allocation5 + $0x70] sm:$0xff]
        %v349 = vld [vmem:[#allocation5 + $0x78] sm:$0xff]
        %v350 = vld [vmem:[#allocation5 + $0x80] sm:$0xff]
        %v351 = vld [vmem:[#allocation5 + $0x88] sm:$0xff]
        %v352 = vld [vmem:[#allocation5 + $0x90] sm:$0xff]
        %v353 = vld [vmem:[#allocation5 + $0x98] sm:$0xff]
        %v354 = vld [vmem:[#allocation5 + $0xa0] sm:$0xff]
        %v355 = vld [vmem:[#allocation5 + $0xa8] sm:$0xff]
        %v356 = vld [vmem:[#allocation5 + $0xb0] sm:$0xff]
        %v357 = vld [vmem:[#allocation5 + $0xb8] sm:$0xff]
        %v358 = vld [vmem:[#allocation5 + $0xc0] sm:$0xff]
        %v359 = vld [vmem:[#allocation5 + $0xc8] sm:$0xff]
        %v360 = vld [vmem:[#allocation5 + $0xd0] sm:$0xff]
        %v361 = vld [vmem:[#allocation5 + $0xd8] sm:$0xff]
        %v362 = vld [vmem:[#allocation5 + $0xe0] sm:$0xff]
        %v363 = vld [vmem:[#allocation5 + $0xe8] sm:$0xff]
        %v364 = vld [vmem:[#allocation5 + $0xf0] sm:$0xff]
        %v365 = vld [vmem:[#allocation5 + $0xf8] sm:$0xff]
        %v366 = vld [vmem:[#allocation5 + $0x100] sm:$0xff]
        %v367 = vld [vmem:[#allocation5 + $0x108] sm:$0xff]
        %v368 = vld [vmem:[#allocation5 + $0x110] sm:$0xff]
        %v369 = vld [vmem:[#allocation5 + $0x118] sm:$0xff]
        %v370 = vld [vmem:[#allocation5 + $0x120] sm:$0xff]
        %v371 = vld [vmem:[#allocation5 + $0x128] sm:$0xff]
        %v372 = vld [vmem:[#allocation5 + $0x130] sm:$0xff]
        %v373 = vld [vmem:[#allocation5 + $0x138] sm:$0xff]
        %v374 = vld [vmem:[#allocation5 + $0x140] sm:$0xff]
        %v375 = vld [vmem:[#allocation5 + $0x148] sm:$0xff]
        %v376 = vld [vmem:[#allocation5 + $0x150] sm:$0xff]
        %v377 = vld [vmem:[#allocation5 + $0x158] sm:$0xff]
        %v378 = vld [vmem:[#allocation5 + $0x160] sm:$0xff]
        %v379 = vld [vmem:[#allocation5 + $0x168] sm:$0xff]
        %v380 = vld [vmem:[#allocation5 + $0x170] sm:$0xff]
        %v381 = vld [vmem:[#allocation5 + $0x178] sm:$0xff]
        %v382 = vld [vmem:[#allocation5 + $0x180] sm:$0xff]
        %v383 = vld [vmem:[#allocation5 + $0x188] sm:$0xff]
        %v384 = vld [vmem:[#allocation5 + $0x190] sm:$0xff]
        %v385 = vld [vmem:[#allocation5 + $0x198] sm:$0xff]
        %v386 = vld [vmem:[#allocation5 + $0x1a0] sm:$0xff]
        %v387 = vld [vmem:[#allocation5 + $0x1a8] sm:$0xff]
        %v388 = vld [vmem:[#allocation5 + $0x1b0] sm:$0xff]
        %v389 = vld [vmem:[#allocation5 + $0x1b8] sm:$0xff]
        %v390 = vld [vmem:[#allocation5 + $0x1c0] sm:$0xff]
        %v391 = vld [vmem:[#allocation5 + $0x1c8] sm:$0xff]
        %v392 = vld [vmem:[#allocation5 + $0x1d0] sm:$0xff]
        %v393 = vld [vmem:[#allocation5 + $0x1d8] sm:$0xff]
        %v394 = vld [vmem:[#allocation5 + $0x1e0] sm:$0xff]
        %v395 = vld [vmem:[#allocation5 + $0x1e8] sm:$0xff]
        %v396 = vld [vmem:[#allocation5 + $0x1f0] sm:$0xff]
        %v397 = vld [vmem:[#allocation5 + $0x1f8] sm:$0xff]
        %v398 = vld [vmem:[#allocation5 + $0x200] sm:$0xff]
        %v399 = vld [vmem:[#allocation5 + $0x208] sm:$0xff]
        %v400 = vld [vmem:[#allocation5 + $0x210] sm:$0xff]
        %v401 = vld [vmem:[#allocation5 + $0x218] sm:$0xff]
        %v402 = vld [vmem:[#allocation5 + $0x220] sm:$0xff]
        %v403 = vld [vmem:[#allocation5 + $0x228] sm:$0xff]
        %v404 = vld [vmem:[#allocation5 + $0x230] sm:$0xff]
        %v405 = vld [vmem:[#allocation5 + $0x238] sm:$0xff]
        %v406 = vld [vmem:[#allocation5 + $0x240] sm:$0xff]
        %v407 = vld [vmem:[#allocation5 + $0x248] sm:$0xff]
        %v408 = vld [vmem:[#allocation5 + $0x250] sm:$0xff]
        %v409 = vld [vmem:[#allocation5 + $0x258] sm:$0xff]
        %v410 = vld [vmem:[#allocation5 + $0x260] sm:$0xff]
        %v411 = vld [vmem:[#allocation5 + $0x268] sm:$0xff]
        %v412 = vld [vmem:[#allocation5 + $0x270] sm:$0xff]
        %v413 = vld [vmem:[#allocation5 + $0x278] sm:$0xff]
        %v414 = vld [vmem:[#allocation5 + $0x280] sm:$0xff]
        %v415 = vld [vmem:[#allocation5 + $0x288] sm:$0xff]
        %v416 = vld [vmem:[#allocation5 + $0x290] sm:$0xff]
        %v417 = vld [vmem:[#allocation5 + $0x298] sm:$0xff]
        %v418 = vld [vmem:[#allocation5 + $0x2a0] sm:$0xff]
        %v419 = vld [vmem:[#allocation5 + $0x2a8] sm:$0xff]
        %v420 = vld [vmem:[#allocation5 + $0x2b0] sm:$0xff]
        %v421 = vld [vmem:[#allocation5 + $0x2b8] sm:$0xff]
        %v422 = vld [vmem:[#allocation5 + $0x2c0] sm:$0xff]
        %v423 = vld [vmem:[#allocation5 + $0x2c8] sm:$0xff]
        %v424 = vld [vmem:[#allocation5 + $0x2d0] sm:$0xff]
        %v425 = vld [vmem:[#allocation5 + $0x2d8] sm:$0xff]
        %v426 = vld [vmem:[#allocation5 + $0x2e0] sm:$0xff]
        %v427 = vld [vmem:[#allocation5 + $0x2e8] sm:$0xff]
        %v428 = vld [vmem:[#allocation5 + $0x2f0] sm:$0xff]
        %v429 = vld [vmem:[#allocation5 + $0x2f8] sm:$0xff]
        %v430 = vld [vmem:[#allocation7] sm:$0x3f]
        %v432 = vperm.slane %v430, 0
        %v433 = vperm.slane %v430, 1
        %v434 = vperm.slane %v430, 2
        %v435 = vperm.slane %v430, 3
        %v436 = vperm.slane %v430, 4
        %v437 = vperm.slane %v430, 5
        %v446 = vunpack.c.l.b16 %v332
        %v447 = vunpack.c.h.b16 %v332
        %v448 = vunpack.c.l.b16 %v333
        %v449 = vunpack.c.h.b16 %v333
        %v450 = vpack.c.b16 %v448, %v446
        %v451 = vpack.c.b16 %v449, %v447
        %v550 = vunpack.c.l.b16 %v334
        %v551 = vunpack.c.h.b16 %v334
        %v552 = vunpack.c.l.b16 %v335
        %v553 = vunpack.c.h.b16 %v335
        %v554 = vunpack.c.l.b16 %v336
        %v555 = vunpack.c.h.b16 %v336
        %v556 = vunpack.c.l.b16 %v337
        %v557 = vunpack.c.h.b16 %v337
        %v558 = vunpack.c.l.b16 %v338
        %v559 = vunpack.c.h.b16 %v338
        %v560 = vunpack.c.l.b16 %v339
        %v561 = vunpack.c.h.b16 %v339
        %v562 = vunpack.c.l.b16 %v340
        %v563 = vunpack.c.h.b16 %v340
        %v564 = vunpack.c.l.b16 %v341
        %v565 = vunpack.c.h.b16 %v341
        %v566 = vunpack.c.l.b16 %v342
        %v567 = vunpack.c.h.b16 %v342
        %v568 = vunpack.c.l.b16 %v343
        %v569 = vunpack.c.h.b16 %v343
        %v570 = vunpack.c.l.b16 %v344
        %v571 = vunpack.c.h.b16 %v344
        %v572 = vunpack.c.l.b16 %v345
        %v573 = vunpack.c.h.b16 %v345
        %v574 = vunpack.c.l.b16 %v346
        %v575 = vunpack.c.h.b16 %v346
        %v576 = vunpack.c.l.b16 %v347
        %v577 = vunpack.c.h.b16 %v347
        %v578 = vunpack.c.l.b16 %v348
        %v579 = vunpack.c.h.b16 %v348
        %v580 = vunpack.c.l.b16 %v349
        %v581 = vunpack.c.h.b16 %v349
        %v582 = vunpack.c.l.b16 %v350
        %v583 = vunpack.c.h.b16 %v350
        %v584 = vunpack.c.l.b16 %v351
        %v585 = vunpack.c.h.b16 %v351
        %v586 = vunpack.c.l.b16 %v352
        %v587 = vunpack.c.h.b16 %v352
        %v588 = vunpack.c.l.b16 %v353
        %v589 = vunpack.c.h.b16 %v353
        %v590 = vunpack.c.l.b16 %v354
        %v591 = vunpack.c.h.b16 %v354
        %v592 = vunpack.c.l.b16 %v355
        %v593 = vunpack.c.h.b16 %v355
        %v594 = vunpack.c.l.b16 %v356
        %v595 = vunpack.c.h.b16 %v356
        %v596 = vunpack.c.l.b16 %v357
        %v597 = vunpack.c.h.b16 %v357
        %v598 = vunpack.c.l.b16 %v358
        %v599 = vunpack.c.h.b16 %v358
        %v600 = vunpack.c.l.b16 %v359
        %v601 = vunpack.c.h.b16 %v359
        %v602 = vunpack.c.l.b16 %v360
        %v603 = vunpack.c.h.b16 %v360
        %v604 = vunpack.c.l.b16 %v361
        %v605 = vunpack.c.h.b16 %v361
        %v606 = vunpack.c.l.b16 %v362
        %v607 = vunpack.c.h.b16 %v362
        %v608 = vunpack.c.l.b16 %v363
        %v609 = vunpack.c.h.b16 %v363
        %v610 = vunpack.c.l.b16 %v364
        %v611 = vunpack.c.h.b16 %v364
        %v612 = vunpack.c.l.b16 %v365
        %v613 = vunpack.c.h.b16 %v365
        %v614 = vunpack.c.l.b16 %v366
        %v615 = vunpack.c.h.b16 %v366
        %v616 = vunpack.c.l.b16 %v367
        %v617 = vunpack.c.h.b16 %v367
        %v618 = vunpack.c.l.b16 %v368
        %v619 = vunpack.c.h.b16 %v368
        %v620 = vunpack.c.l.b16 %v369
        %v621 = vunpack.c.h.b16 %v369
        %v622 = vunpack.c.l.b16 %v370
        %v623 = vunpack.c.h.b16 %v370
        %v624 = vunpack.c.l.b16 %v371
        %v625 = vunpack.c.h.b16 %v371
        %v626 = vunpack.c.l.b16 %v372
        %v627 = vunpack.c.h.b16 %v372
        %v628 = vunpack.c.l.b16 %v373
        %v629 = vunpack.c.h.b16 %v373
        %v630 = vunpack.c.l.b16 %v374
        %v631 = vunpack.c.h.b16 %v374
        %v632 = vunpack.c.l.b16 %v375
        %v633 = vunpack.c.h.b16 %v375
        %v634 = vunpack.c.l.b16 %v376
        %v635 = vunpack.c.h.b16 %v376
        %v636 = vunpack.c.l.b16 %v377
        %v637 = vunpack.c.h.b16 %v377
        %v638 = vunpack.c.l.b16 %v378
        %v639 = vunpack.c.h.b16 %v378
        %v640 = vunpack.c.l.b16 %v379
        %v641 = vunpack.c.h.b16 %v379
        %v642 = vunpack.c.l.b16 %v380
        %v643 = vunpack.c.h.b16 %v380
        %v644 = vunpack.c.l.b16 %v381
        %v645 = vunpack.c.h.b16 %v381
        %v646 = vunpack.c.l.b16 %v382
        %v647 = vunpack.c.h.b16 %v382
        %v648 = vunpack.c.l.b16 %v383
        %v649 = vunpack.c.h.b16 %v383
        %v650 = vunpack.c.l.b16 %v384
        %v651 = vunpack.c.h.b16 %v384
        %v652 = vunpack.c.l.b16 %v385
        %v653 = vunpack.c.h.b16 %v385
        %v654 = vunpack.c.l.b16 %v386
        %v655 = vunpack.c.h.b16 %v386
        %v656 = vunpack.c.l.b16 %v387
        %v657 = vunpack.c.h.b16 %v387
        %v658 = vunpack.c.l.b16 %v388
        %v659 = vunpack.c.h.b16 %v388
        %v660 = vunpack.c.l.b16 %v389
        %v661 = vunpack.c.h.b16 %v389
        %v662 = vunpack.c.l.b16 %v390
        %v663 = vunpack.c.h.b16 %v390
        %v664 = vunpack.c.l.b16 %v391
        %v665 = vunpack.c.h.b16 %v391
        %v666 = vunpack.c.l.b16 %v392
        %v667 = vunpack.c.h.b16 %v392
        %v668 = vunpack.c.l.b16 %v393
        %v669 = vunpack.c.h.b16 %v393
        %v670 = vunpack.c.l.b16 %v394
        %v671 = vunpack.c.h.b16 %v394
        %v672 = vunpack.c.l.b16 %v395
        %v673 = vunpack.c.h.b16 %v395
        %v674 = vunpack.c.l.b16 %v396
        %v675 = vunpack.c.h.b16 %v396
        %v676 = vunpack.c.l.b16 %v397
        %v677 = vunpack.c.h.b16 %v397
        %v678 = vunpack.c.l.b16 %v398
        %v679 = vunpack.c.h.b16 %v398
        %v680 = vunpack.c.l.b16 %v399
        %v681 = vunpack.c.h.b16 %v399
        %v682 = vunpack.c.l.b16 %v400
        %v683 = vunpack.c.h.b16 %v400
        %v684 = vunpack.c.l.b16 %v401
        %v685 = vunpack.c.h.b16 %v401
        %v686 = vunpack.c.l.b16 %v402
        %v687 = vunpack.c.h.b16 %v402
        %v688 = vunpack.c.l.b16 %v403
        %v689 = vunpack.c.h.b16 %v403
        %v690 = vunpack.c.l.b16 %v404
        %v691 = vunpack.c.h.b16 %v404
        %v692 = vunpack.c.l.b16 %v405
        %v693 = vunpack.c.h.b16 %v405
        %v694 = vunpack.c.l.b16 %v406
        %v695 = vunpack.c.h.b16 %v406
        %v696 = vunpack.c.l.b16 %v407
        %v697 = vunpack.c.h.b16 %v407
        %v698 = vunpack.c.l.b16 %v408
        %v699 = vunpack.c.h.b16 %v408
        %v700 = vunpack.c.l.b16 %v409
        %v701 = vunpack.c.h.b16 %v409
        %v702 = vunpack.c.l.b16 %v410
        %v703 = vunpack.c.h.b16 %v410
        %v704 = vunpack.c.l.b16 %v411
        %v705 = vunpack.c.h.b16 %v411
        %v706 = vunpack.c.l.b16 %v412
        %v707 = vunpack.c.h.b16 %v412
        %v708 = vunpack.c.l.b16 %v413
        %v709 = vunpack.c.h.b16 %v413
        %v710 = vunpack.c.l.b16 %v414
        %v711 = vunpack.c.h.b16 %v414
        %v712 = vunpack.c.l.b16 %v415
        %v713 = vunpack.c.h.b16 %v415
        %v714 = vunpack.c.l.b16 %v416
        %v715 = vunpack.c.h.b16 %v416
        %v716 = vunpack.c.l.b16 %v417
        %v717 = vunpack.c.h.b16 %v417
        %v718 = vunpack.c.l.b16 %v418
        %v719 = vunpack.c.h.b16 %v418
        %v720 = vunpack.c.l.b16 %v419
        %v721 = vunpack.c.h.b16 %v419
        %v722 = vunpack.c.l.b16 %v420
        %v723 = vunpack.c.h.b16 %v420
        %v724 = vunpack.c.l.b16 %v421
        %v725 = vunpack.c.h.b16 %v421
        %v726 = vunpack.c.l.b16 %v422
        %v727 = vunpack.c.h.b16 %v422
        %v728 = vunpack.c.l.b16 %v423
        %v729 = vunpack.c.h.b16 %v423
        %v730 = vunpack.c.l.b16 %v424
        %v731 = vunpack.c.h.b16 %v424
        %v732 = vunpack.c.l.b16 %v425
        %v733 = vunpack.c.h.b16 %v425
        %v734 = vunpack.c.l.b16 %v426
        %v735 = vunpack.c.h.b16 %v426
        %v736 = vunpack.c.l.b16 %v427
        %v737 = vunpack.c.h.b16 %v427
        %v738 = vunpack.c.l.b16 %v428
        %v739 = vunpack.c.h.b16 %v428
        %v740 = vunpack.c.l.b16 %v429
        %v741 = vunpack.c.h.b16 %v429
        %v742 = vpack.c.b16 %v556, %v550
        %v743 = vpack.c.b16 %v557, %v551
        %v744 = vpack.c.b16 %v558, %v552
        %v745 = vpack.c.b16 %v559, %v553
        %v746 = vpack.c.b16 %v560, %v554
        %v747 = vpack.c.b16 %v561, %v555
        %v748 = vpack.c.b16 %v568, %v562
        %v749 = vpack.c.b16 %v569, %v563
        %v750 = vpack.c.b16 %v570, %v564
        %v751 = vpack.c.b16 %v571, %v565
        %v752 = vpack.c.b16 %v572, %v566
        %v753 = vpack.c.b16 %v573, %v567
        %v754 = vpack.c.b16 %v580, %v574
        %v755 = vpack.c.b16 %v581, %v575
        %v756 = vpack.c.b16 %v582, %v576
        %v757 = vpack.c.b16 %v583, %v577
        %v758 = vpack.c.b16 %v584, %v578
        %v759 = vpack.c.b16 %v585, %v579
        %v760 = vpack.c.b16 %v592, %v586
        %v761 = vpack.c.b16 %v593, %v587
        %v762 = vpack.c.b16 %v594, %v588
        %v763 = vpack.c.b16 %v595, %v589
        %v764 = vpack.c.b16 %v596, %v590
        %v765 = vpack.c.b16 %v597, %v591
        %v766 = vpack.c.b16 %v604, %v598
        %v767 = vpack.c.b16 %v605, %v599
        %v768 = vpack.c.b16 %v606, %v600
        %v769 = vpack.c.b16 %v607, %v601
        %v770 = vpack.c.b16 %v608, %v602
        %v771 = vpack.c.b16 %v609, %v603
        %v772 = vpack.c.b16 %v616, %v610
        %v773 = vpack.c.b16 %v617, %v611
        %v774 = vpack.c.b16 %v618, %v612
        %v775 = vpack.c.b16 %v619, %v613
        %v776 = vpack.c.b16 %v620, %v614
        %v777 = vpack.c.b16 %v621, %v615
        %v778 = vpack.c.b16 %v628, %v622
        %v779 = vpack.c.b16 %v629, %v623
        %v780 = vpack.c.b16 %v630, %v624
        %v781 = vpack.c.b16 %v631, %v625
        %v782 = vpack.c.b16 %v632, %v626
        %v783 = vpack.c.b16 %v633, %v627
        %v784 = vpack.c.b16 %v640, %v634
        %v785 = vpack.c.b16 %v641, %v635
        %v786 = vpack.c.b16 %v642, %v636
        %v787 = vpack.c.b16 %v643, %v637
        %v788 = vpack.c.b16 %v644, %v638
        %v789 = vpack.c.b16 %v645, %v639
        %v790 = vpack.c.b16 %v652, %v646
        %v791 = vpack.c.b16 %v653, %v647
        %v792 = vpack.c.b16 %v654, %v648
        %v793 = vpack.c.b16 %v655, %v649
        %v794 = vpack.c.b16 %v656, %v650
        %v795 = vpack.c.b16 %v657, %v651
        %v796 = vpack.c.b16 %v664, %v658
        %v797 = vpack.c.b16 %v665, %v659
        %v798 = vpack.c.b16 %v666, %v660
        %v799 = vpack.c.b16 %v667, %v661
        %v800 = vpack.c.b16 %v668, %v662
        %v801 = vpack.c.b16 %v669, %v663
        %v802 = vpack.c.b16 %v676, %v670
        %v803 = vpack.c.b16 %v677, %v671
        %v804 = vpack.c.b16 %v678, %v672
        %v805 = vpack.c.b16 %v679, %v673
        %v806 = vpack.c.b16 %v680, %v674
        %v807 = vpack.c.b16 %v681, %v675
        %v808 = vpack.c.b16 %v688, %v682
        %v809 = vpack.c.b16 %v689, %v683
        %v810 = vpack.c.b16 %v690, %v684
        %v811 = vpack.c.b16 %v691, %v685
        %v812 = vpack.c.b16 %v692, %v686
        %v813 = vpack.c.b16 %v693, %v687
        %v814 = vpack.c.b16 %v700, %v694
        %v815 = vpack.c.b16 %v701, %v695
        %v816 = vpack.c.b16 %v702, %v696
        %v817 = vpack.c.b16 %v703, %v697
        %v818 = vpack.c.b16 %v704, %v698
        %v819 = vpack.c.b16 %v705, %v699
        %v820 = vpack.c.b16 %v712, %v706
        %v821 = vpack.c.b16 %v713, %v707
        %v822 = vpack.c.b16 %v714, %v708
        %v823 = vpack.c.b16 %v715, %v709
        %v824 = vpack.c.b16 %v716, %v710
        %v825 = vpack.c.b16 %v717, %v711
        %v826 = vpack.c.b16 %v724, %v718
        %v827 = vpack.c.b16 %v725, %v719
        %v828 = vpack.c.b16 %v726, %v720
        %v829 = vpack.c.b16 %v727, %v721
        %v830 = vpack.c.b16 %v728, %v722
        %v831 = vpack.c.b16 %v729, %v723
        %v832 = vpack.c.b16 %v736, %v730
        %v833 = vpack.c.b16 %v737, %v731
        %v834 = vpack.c.b16 %v738, %v732
        %v835 = vpack.c.b16 %v739, %v733
        %v836 = vpack.c.b16 %v740, %v734
        %v837 = vpack.c.b16 %v741, %v735
        %934 = vmatpush.bf16.msra.mxu0 %v784
        %935 = vmatpush.bf16.msra.mxu0 %v778
        %936 = vmatpush.bf16.msra.mxu0 %v772
        %937 = vmatpush.bf16.msra.mxu0 %v766
        %938 = vmatpush.bf16.msra.mxu0 %v760
        %939 = vmatpush.bf16.msra.mxu0 %v754
        %940 = vmatpush.bf16.msra.mxu0 %v748
        %941 = vmatpush.bf16.msra.mxu0 %v742
        %942 = vmatmul.bf16.gmra.mxu0 %v450
        %v943 = vpop.f32.mrf.mxu0
        %v944 = vadd.f32 %v432, %v943
        %v945 = vpop.f32.mrf.mxu0
        %v946 = vadd.f32 %v432, %v945
        %947 = vdwg.mxu0
        %948 = vmatpush.bf16.msra.mxu0 %v832
        %949 = vmatpush.bf16.msra.mxu0 %v826
        %950 = vmatpush.bf16.msra.mxu0 %v820
        %951 = vmatpush.bf16.msra.mxu0 %v814
        %952 = vmatpush.bf16.msra.mxu0 %v808
        %953 = vmatpush.bf16.msra.mxu0 %v802
        %954 = vmatpush.bf16.msra.mxu0 %v796
        %955 = vmatpush.bf16.msra.mxu0 %v790
        %956 = vmatmul.bf16.gmra.mxu0 %v451
        %v957 = vpop.f32.mrf.mxu0
        %v958 = vadd.f32 %v944, %v957
        %v959 = vpop.f32.mrf.mxu0
        %v960 = vadd.f32 %v946, %v959
        %961 = vdwg.mxu0
        %962 = vmatpush.bf16.msra.mxu0 %v785
        %963 = vmatpush.bf16.msra.mxu0 %v779
        %964 = vmatpush.bf16.msra.mxu0 %v773
        %965 = vmatpush.bf16.msra.mxu0 %v767
        %966 = vmatpush.bf16.msra.mxu0 %v761
        %967 = vmatpush.bf16.msra.mxu0 %v755
        %968 = vmatpush.bf16.msra.mxu0 %v749
        %969 = vmatpush.bf16.msra.mxu0 %v743
        %970 = vmatmul.bf16.gmra.mxu0 %v450
        %v971 = vpop.f32.mrf.mxu0
        %v972 = vadd.f32 %v433, %v971
        %v973 = vpop.f32.mrf.mxu0
        %v974 = vadd.f32 %v433, %v973
        %975 = vdwg.mxu0
        %976 = vmatpush.bf16.msra.mxu0 %v833
        %977 = vmatpush.bf16.msra.mxu0 %v827
        %978 = vmatpush.bf16.msra.mxu0 %v821
        %979 = vmatpush.bf16.msra.mxu0 %v815
        %980 = vmatpush.bf16.msra.mxu0 %v809
        %981 = vmatpush.bf16.msra.mxu0 %v803
        %982 = vmatpush.bf16.msra.mxu0 %v797
        %983 = vmatpush.bf16.msra.mxu0 %v791
        %984 = vmatmul.bf16.gmra.mxu0 %v451
        %v985 = vpop.f32.mrf.mxu0
        %v986 = vadd.f32 %v972, %v985
        %v987 = vpop.f32.mrf.mxu0
        %v988 = vadd.f32 %v974, %v987
        %989 = vdwg.mxu0
        %990 = vmatpush.bf16.msra.mxu0 %v786
        %991 = vmatpush.bf16.msra.mxu0 %v780
        %992 = vmatpush.bf16.msra.mxu0 %v774
        %993 = vmatpush.bf16.msra.mxu0 %v768
        %994 = vmatpush.bf16.msra.mxu0 %v762
        %995 = vmatpush.bf16.msra.mxu0 %v756
        %996 = vmatpush.bf16.msra.mxu0 %v750
        %997 = vmatpush.bf16.msra.mxu0 %v744
        %998 = vmatmul.bf16.gmra.mxu0 %v450
        %v999 = vpop.f32.mrf.mxu0
        %v1000 = vadd.f32 %v434, %v999
        %v1001 = vpop.f32.mrf.mxu0
        %v1002 = vadd.f32 %v434, %v1001
        %1003 = vdwg.mxu0
        %1004 = vmatpush.bf16.msra.mxu0 %v834
        %1005 = vmatpush.bf16.msra.mxu0 %v828
        %1006 = vmatpush.bf16.msra.mxu0 %v822
        %1007 = vmatpush.bf16.msra.mxu0 %v816
        %1008 = vmatpush.bf16.msra.mxu0 %v810
        %1009 = vmatpush.bf16.msra.mxu0 %v804
        %1010 = vmatpush.bf16.msra.mxu0 %v798
        %1011 = vmatpush.bf16.msra.mxu0 %v792
        %1012 = vmatmul.bf16.gmra.mxu0 %v451
        %v1013 = vpop.f32.mrf.mxu0
        %v1014 = vadd.f32 %v1000, %v1013
        %v1015 = vpop.f32.mrf.mxu0
        %v1016 = vadd.f32 %v1002, %v1015
        %1017 = vdwg.mxu0
        %1018 = vmatpush.bf16.msra.mxu0 %v787
        %1019 = vmatpush.bf16.msra.mxu0 %v781
        %1020 = vmatpush.bf16.msra.mxu0 %v775
        %1021 = vmatpush.bf16.msra.mxu0 %v769
        %1022 = vmatpush.bf16.msra.mxu0 %v763
        %1023 = vmatpush.bf16.msra.mxu0 %v757
        %1024 = vmatpush.bf16.msra.mxu0 %v751
        %1025 = vmatpush.bf16.msra.mxu0 %v745
        %1026 = vmatmul.bf16.gmra.mxu0 %v450
        %v1027 = vpop.f32.mrf.mxu0
        %v1028 = vadd.f32 %v435, %v1027
        %v1029 = vpop.f32.mrf.mxu0
        %v1030 = vadd.f32 %v435, %v1029
        %1031 = vdwg.mxu0
        %1032 = vmatpush.bf16.msra.mxu0 %v835
        %1033 = vmatpush.bf16.msra.mxu0 %v829
        %1034 = vmatpush.bf16.msra.mxu0 %v823
        %1035 = vmatpush.bf16.msra.mxu0 %v817
        %1036 = vmatpush.bf16.msra.mxu0 %v811
        %1037 = vmatpush.bf16.msra.mxu0 %v805
        %1038 = vmatpush.bf16.msra.mxu0 %v799
        %1039 = vmatpush.bf16.msra.mxu0 %v793
        %1040 = vmatmul.bf16.gmra.mxu0 %v451
        %v1041 = vpop.f32.mrf.mxu0
        %v1042 = vadd.f32 %v1028, %v1041
        %v1043 = vpop.f32.mrf.mxu0
        %v1044 = vadd.f32 %v1030, %v1043
        %1045 = vdwg.mxu0
        %1046 = vmatpush.bf16.msra.mxu0 %v788
        %1047 = vmatpush.bf16.msra.mxu0 %v782
        %1048 = vmatpush.bf16.msra.mxu0 %v776
        %1049 = vmatpush.bf16.msra.mxu0 %v770
        %1050 = vmatpush.bf16.msra.mxu0 %v764
        %1051 = vmatpush.bf16.msra.mxu0 %v758
        %1052 = vmatpush.bf16.msra.mxu0 %v752
        %1053 = vmatpush.bf16.msra.mxu0 %v746
        %1054 = vmatmul.bf16.gmra.mxu0 %v450
        %v1055 = vpop.f32.mrf.mxu0
        %v1056 = vadd.f32 %v436, %v1055
        %v1057 = vpop.f32.mrf.mxu0
        %v1058 = vadd.f32 %v436, %v1057
        %1059 = vdwg.mxu0
        %1060 = vmatpush.bf16.msra.mxu0 %v836
        %1061 = vmatpush.bf16.msra.mxu0 %v830
        %1062 = vmatpush.bf16.msra.mxu0 %v824
        %1063 = vmatpush.bf16.msra.mxu0 %v818
        %1064 = vmatpush.bf16.msra.mxu0 %v812
        %1065 = vmatpush.bf16.msra.mxu0 %v806
        %1066 = vmatpush.bf16.msra.mxu0 %v800
        %1067 = vmatpush.bf16.msra.mxu0 %v794
        %1068 = vmatmul.bf16.gmra.mxu0 %v451
        %v1069 = vpop.f32.mrf.mxu0
        %v1070 = vadd.f32 %v1056, %v1069
        %v1071 = vpop.f32.mrf.mxu0
        %v1072 = vadd.f32 %v1058, %v1071
        %1073 = vdwg.mxu0
        %1074 = vmatpush.bf16.msra.mxu0 %v789
        %1075 = vmatpush.bf16.msra.mxu0 %v783
        %1076 = vmatpush.bf16.msra.mxu0 %v777
        %1077 = vmatpush.bf16.msra.mxu0 %v771
        %1078 = vmatpush.bf16.msra.mxu0 %v765
        %1079 = vmatpush.bf16.msra.mxu0 %v759
        %1080 = vmatpush.bf16.msra.mxu0 %v753
        %1081 = vmatpush.bf16.msra.mxu0 %v747
        %1082 = vmatmul.bf16.gmra.mxu0 %v450
        %v1083 = vpop.f32.mrf.mxu0
        %v1084 = vadd.f32 %v437, %v1083
        %v1085 = vpop.f32.mrf.mxu0
        %v1086 = vadd.f32 %v437, %v1085
        %1087 = vdwg.mxu0
        %1088 = vmatpush.bf16.msra.mxu0 %v837
        %1089 = vmatpush.bf16.msra.mxu0 %v831
        %1090 = vmatpush.bf16.msra.mxu0 %v825
        %1091 = vmatpush.bf16.msra.mxu0 %v819
        %1092 = vmatpush.bf16.msra.mxu0 %v813
        %1093 = vmatpush.bf16.msra.mxu0 %v807
        %1094 = vmatpush.bf16.msra.mxu0 %v801
        %1095 = vmatpush.bf16.msra.mxu0 %v795
        %1096 = vmatmul.bf16.gmra.mxu0 %v451
        %v1097 = vpop.f32.mrf.mxu0
        %v1098 = vadd.f32 %v1084, %v1097
        %v1099 = vpop.f32.mrf.mxu0
        %v1100 = vadd.f32 %v1086, %v1099
        %1101 = vdwg.mxu0
        %v1102 = vmul.f32 %v958, 0.088388346
        %v1103 = vmul.f32 %v960, 0.088388346
        %v1104 = vpack.c.bf16 %v1102, %v1102
        %v1105 = vpack.c.bf16 %v1103, %v1103
        %v1106 = vpack.c.bf16 %v986, %v986
        %v1107 = vpack.c.bf16 %v988, %v988
        %v1108 = vpack.c.bf16 %v1014, %v1014
        %v1109 = vpack.c.bf16 %v1016, %v1016
        %1110 = vmatpush.bf16.xpose.msra.mxu0 0
        %1111 = vmatpush.bf16.xpose.msra.mxu0 0
        %1112 = vmatpush.bf16.xpose.msra.mxu0 0
        %1113 = vmatpush.bf16.xpose.msra.mxu0 0
        %1114 = vmatpush.bf16.xpose.msra.mxu0 0
        %1115 = vmatpush.bf16.xpose.msra.mxu0 0
        %1116 = vmatpush.bf16.xpose.msra.mxu0 0
        %1117 = vmatpush.bf16.xpose.msra.mxu0 %v1106
        %1118 = vmatmul.bf16.gmra.mxu0 %v1104
        %v1119 = vpop.f32.mrf.mxu0
        %v1120 = vadd.f32 0.0, %v1119
        %v1121 = vpop.f32.mrf.mxu0
        %1122 = vdwg.mxu0
        %1123 = vmatpush.bf16.xpose.msra.mxu0 0
        %1124 = vmatpush.bf16.xpose.msra.mxu0 0
        %1125 = vmatpush.bf16.xpose.msra.mxu0 0
        %1126 = vmatpush.bf16.xpose.msra.mxu0 0
        %1127 = vmatpush.bf16.xpose.msra.mxu0 0
        %1128 = vmatpush.bf16.xpose.msra.mxu0 0
        %1129 = vmatpush.bf16.xpose.msra.mxu0 0
        %1130 = vmatpush.bf16.xpose.msra.mxu0 %v1107
        %1131 = vmatmul.bf16.gmra.mxu0 %v1105
        %v1132 = vpop.f32.mrf.mxu0
        %v1133 = vadd.f32 0.0, %v1132
        %v1134 = vpop.f32.mrf.mxu0
        %1135 = vdwg.mxu0
        %vm1136 = vcmask 64512
        %v1137 = vsel %vm1136, %v1120, -inf
        %1138 = vmax.xlane.f32.xlu0 %v1137
        %v1139 = vpop.xlane.xlu0 %1138
        %v1140 = vsel %vm1136, %v1133, -inf
        %1141 = vmax.xlane.f32.xlu0 %v1140
        %v1142 = vpop.xlane.xlu0 %1141
        %v1143 = vsub.f32 %v1120, %v1139
        %v1144 = vsub.f32 %v1133, %v1142
        %v1145 = vmul.f32 %v1143, 1.442695
        %v1146 = vpow.pop %v1145
        %v1147 = vmul.f32 %v1144, 1.442695
        %v1148 = vpow.pop %v1147
        %v1149 = vsel %vm1136, %v1146, 0.0
        %1150 = vadd.xlane.f32.xlu0 %v1149
        %v1151 = vpop.xlane.xlu0 %1150
        %v1152 = vsel %vm1136, %v1148, 0.0
        %1153 = vadd.xlane.f32.xlu0 %v1152
        %v1154 = vpop.xlane.xlu0 %1153
        %v1155 = vrcp.pop %v1151
        %v1156 = vrcp.pop %v1154
        %v1157 = vmul.f32 %v1146, %v1155
        %v1158 = vmul.f32 %v1148, %v1156
        %v1159 = vpack.c.bf16 %v1157, %v1157
        %v1160 = vpack.c.bf16 %v1158, %v1158
        %v1162 = vsel %vm1136, %v1159, 0
        %vm1164 = vcmask 1043456
        %v1166 = vsel %vm1164, %v1108, 0
        %1168 = vmatpush.bf16.msra.mxu0 0
        %1169 = vmatpush.bf16.msra.mxu0 0
        %1170 = vmatpush.bf16.msra.mxu0 0
        %1171 = vmatpush.bf16.msra.mxu0 0
        %1172 = vmatpush.bf16.msra.mxu0 0
        %1173 = vmatpush.bf16.msra.mxu0 0
        %1174 = vmatpush.bf16.msra.mxu0 0
        %1175 = vmatpush.bf16.msra.mxu0 %v1166
        %1176 = vmatmul.bf16.gmra.mxu0 %v1162
        %v1177 = vpop.f32.mrf.mxu0
        %v1178 = vadd.f32 0.0, %v1177
        %v1179 = vpop.f32.mrf.mxu0
        %1180 = vdwg.mxu0
        %v1182 = vsel %vm1136, %v1160, 0
        %v1185 = vsel %vm1164, %v1109, 0
        %1187 = vmatpush.bf16.msra.mxu0 0
        %1188 = vmatpush.bf16.msra.mxu0 0
        %1189 = vmatpush.bf16.msra.mxu0 0
        %1190 = vmatpush.bf16.msra.mxu0 0
        %1191 = vmatpush.bf16.msra.mxu0 0
        %1192 = vmatpush.bf16.msra.mxu0 0
        %1193 = vmatpush.bf16.msra.mxu0 0
        %1194 = vmatpush.bf16.msra.mxu0 %v1185
        %1195 = vmatmul.bf16.gmra.mxu0 %v1182
        %v1196 = vpop.f32.mrf.mxu0
        %v1197 = vadd.f32 0.0, %v1196
        %v1198 = vpop.f32.mrf.mxu0
        %1199 = vdwg.mxu0
        %v1200 = vpack.c.bf16 %v1178, %v1178
        %v1201 = vpack.c.bf16 %v1197, %v1197
        %v1202 = vmul.f32 %v1042, 0.088388346
        %v1203 = vmul.f32 %v1044, 0.088388346
        %v1204 = vpack.c.bf16 %v1202, %v1202
        %v1205 = vpack.c.bf16 %v1203, %v1203
        %v1206 = vpack.c.bf16 %v1070, %v1070
        %v1207 = vpack.c.bf16 %v1072, %v1072
        %v1208 = vpack.c.bf16 %v1098, %v1098
        %v1209 = vpack.c.bf16 %v1100, %v1100
        %1210 = vmatpush.bf16.xpose.msra.mxu0 0
        %1211 = vmatpush.bf16.xpose.msra.mxu0 0
        %1212 = vmatpush.bf16.xpose.msra.mxu0 0
        %1213 = vmatpush.bf16.xpose.msra.mxu0 0
        %1214 = vmatpush.bf16.xpose.msra.mxu0 0
        %1215 = vmatpush.bf16.xpose.msra.mxu0 0
        %1216 = vmatpush.bf16.xpose.msra.mxu0 0
        %1217 = vmatpush.bf16.xpose.msra.mxu0 %v1206
        %1218 = vmatmul.bf16.gmra.mxu0 %v1204
        %v1219 = vpop.f32.mrf.mxu0
        %v1220 = vadd.f32 0.0, %v1219
        %v1221 = vpop.f32.mrf.mxu0
        %1222 = vdwg.mxu0
        %1223 = vmatpush.bf16.xpose.msra.mxu0 0
        %1224 = vmatpush.bf16.xpose.msra.mxu0 0
        %1225 = vmatpush.bf16.xpose.msra.mxu0 0
        %1226 = vmatpush.bf16.xpose.msra.mxu0 0
        %1227 = vmatpush.bf16.xpose.msra.mxu0 0
        %1228 = vmatpush.bf16.xpose.msra.mxu0 0
        %1229 = vmatpush.bf16.xpose.msra.mxu0 0
        %1230 = vmatpush.bf16.xpose.msra.mxu0 %v1207
        %1231 = vmatmul.bf16.gmra.mxu0 %v1205
        %v1232 = vpop.f32.mrf.mxu0
        %v1233 = vadd.f32 0.0, %v1232
        %v1234 = vpop.f32.mrf.mxu0
        %1235 = vdwg.mxu0
        %v1236 = vsel %vm1136, %v1220, -inf
        %1237 = vmax.xlane.f32.xlu0 %v1236
        %v1238 = vpop.xlane.xlu0 %1237
        %v1239 = vsel %vm1136, %v1233, -inf
        %1240 = vmax.xlane.f32.xlu0 %v1239
        %v1241 = vpop.xlane.xlu0 %1240
        %v1242 = vsub.f32 %v1220, %v1238
        %v1243 = vsub.f32 %v1233, %v1241
        %v1244 = vmul.f32 %v1242, 1.442695
        %v1245 = vpow.pop %v1244
        %v1246 = vmul.f32 %v1243, 1.442695
        %v1247 = vpow.pop %v1246
        %v1248 = vsel %vm1136, %v1245, 0.0
        %1249 = vadd.xlane.f32.xlu0 %v1248
        %v1250 = vpop.xlane.xlu0 %1249
        %v1251 = vsel %vm1136, %v1247, 0.0
        %1252 = vadd.xlane.f32.xlu0 %v1251
        %v1253 = vpop.xlane.xlu0 %1252
        %v1254 = vrcp.pop %v1250
        %v1255 = vrcp.pop %v1253
        %v1256 = vmul.f32 %v1245, %v1254
        %v1257 = vmul.f32 %v1247, %v1255
        %v1258 = vpack.c.bf16 %v1256, %v1256
        %v1259 = vpack.c.bf16 %v1257, %v1257
        %v1261 = vsel %vm1136, %v1258, 0
        %v1264 = vsel %vm1164, %v1208, 0
        %1266 = vmatpush.bf16.msra.mxu0 0
        %1267 = vmatpush.bf16.msra.mxu0 0
        %1268 = vmatpush.bf16.msra.mxu0 0
        %1269 = vmatpush.bf16.msra.mxu0 0
        %1270 = vmatpush.bf16.msra.mxu0 0
        %1271 = vmatpush.bf16.msra.mxu0 0
        %1272 = vmatpush.bf16.msra.mxu0 0
        %1273 = vmatpush.bf16.msra.mxu0 %v1264
        %1274 = vmatmul.bf16.gmra.mxu0 %v1261
        %v1275 = vpop.f32.mrf.mxu0
        %v1276 = vadd.f32 0.0, %v1275
        %v1277 = vpop.f32.mrf.mxu0
        %1278 = vdwg.mxu0
        %v1280 = vsel %vm1136, %v1259, 0
        %v1283 = vsel %vm1164, %v1209, 0
        %1285 = vmatpush.bf16.msra.mxu0 0
        %1286 = vmatpush.bf16.msra.mxu0 0
        %1287 = vmatpush.bf16.msra.mxu0 0
        %1288 = vmatpush.bf16.msra.mxu0 0
        %1289 = vmatpush.bf16.msra.mxu0 0
        %1290 = vmatpush.bf16.msra.mxu0 0
        %1291 = vmatpush.bf16.msra.mxu0 0
        %1292 = vmatpush.bf16.msra.mxu0 %v1283
        %1293 = vmatmul.bf16.gmra.mxu0 %v1280
        %v1294 = vpop.f32.mrf.mxu0
        %v1295 = vadd.f32 0.0, %v1294
        %v1296 = vpop.f32.mrf.mxu0
        %1297 = vdwg.mxu0
        %v1298 = vpack.c.bf16 %v1276, %v1276
        %v1299 = vpack.c.bf16 %v1295, %v1295
        %v1302 = vunpack.c.l.b16 %v1200
        %v1303 = vunpack.c.l.b16 %v1201
        %v1304 = vpack.c.b16 %v1303, %v1302
        %v1308 = vunpack.c.l.b16 %v1298
        %v1309 = vunpack.c.l.b16 %v1299
        %v1310 = vpack.c.b16 %v1309, %v1308
        %v1312 = vld [vmem:[#allocation8] sm:$0xff]
        %v1313 = vld [vmem:[#allocation8 + $0x8] sm:$0xff]
        %v1314 = vld [vmem:[#allocation8 + $0x10] sm:$0xff]
        %v1315 = vld [vmem:[#allocation8 + $0x18] sm:$0xff]
        %v1316 = vld [vmem:[#allocation8 + $0x20] sm:$0xff]
        %v1317 = vld [vmem:[#allocation8 + $0x28] sm:$0xff]
        %v1318 = vld [vmem:[#allocation8 + $0x30] sm:$0xff]
        %v1319 = vld [vmem:[#allocation8 + $0x38] sm:$0xff]
        %v1320 = vld [vmem:[#allocation8 + $0x40] sm:$0xff]
        %v1321 = vld [vmem:[#allocation8 + $0x48] sm:$0xff]
        %v1322 = vld [vmem:[#allocation8 + $0x50] sm:$0xff]
        %v1323 = vld [vmem:[#allocation8 + $0x58] sm:$0xff]
        %v1324 = vld [vmem:[#allocation8 + $0x60] sm:$0xff]
        %v1325 = vld [vmem:[#allocation8 + $0x68] sm:$0xff]
        %v1326 = vld [vmem:[#allocation8 + $0x70] sm:$0xff]
        %v1327 = vld [vmem:[#allocation8 + $0x78] sm:$0xff]
        %v1328 = vld [vmem:[#allocation8 + $0x80] sm:$0xff]
        %v1329 = vld [vmem:[#allocation8 + $0x88] sm:$0xff]
        %v1330 = vld [vmem:[#allocation8 + $0x90] sm:$0xff]
        %v1331 = vld [vmem:[#allocation8 + $0x98] sm:$0xff]
        %v1332 = vld [vmem:[#allocation8 + $0xa0] sm:$0xff]
        %v1333 = vld [vmem:[#allocation8 + $0xa8] sm:$0xff]
        %v1334 = vld [vmem:[#allocation8 + $0xb0] sm:$0xff]
        %v1335 = vld [vmem:[#allocation8 + $0xb8] sm:$0xff]
        %v1336 = vld [vmem:[#allocation8 + $0xc0] sm:$0xff]
        %v1337 = vld [vmem:[#allocation8 + $0xc8] sm:$0xff]
        %v1338 = vld [vmem:[#allocation8 + $0xd0] sm:$0xff]
        %v1339 = vld [vmem:[#allocation8 + $0xd8] sm:$0xff]
        %v1340 = vld [vmem:[#allocation8 + $0xe0] sm:$0xff]
        %v1341 = vld [vmem:[#allocation8 + $0xe8] sm:$0xff]
        %v1342 = vld [vmem:[#allocation8 + $0xf0] sm:$0xff]
        %v1343 = vld [vmem:[#allocation8 + $0xf8] sm:$0xff]
        %v1376 = vunpack.c.l.b16 %v1312
        %v1377 = vunpack.c.h.b16 %v1312
        %v1378 = vunpack.c.l.b16 %v1313
        %v1379 = vunpack.c.h.b16 %v1313
        %v1380 = vunpack.c.l.b16 %v1314
        %v1381 = vunpack.c.h.b16 %v1314
        %v1382 = vunpack.c.l.b16 %v1315
        %v1383 = vunpack.c.h.b16 %v1315
        %v1384 = vunpack.c.l.b16 %v1316
        %v1385 = vunpack.c.h.b16 %v1316
        %v1386 = vunpack.c.l.b16 %v1317
        %v1387 = vunpack.c.h.b16 %v1317
        %v1388 = vunpack.c.l.b16 %v1318
        %v1389 = vunpack.c.h.b16 %v1318
        %v1390 = vunpack.c.l.b16 %v1319
        %v1391 = vunpack.c.h.b16 %v1319
        %v1392 = vunpack.c.l.b16 %v1320
        %v1393 = vunpack.c.h.b16 %v1320
        %v1394 = vunpack.c.l.b16 %v1321
        %v1395 = vunpack.c.h.b16 %v1321
        %v1396 = vunpack.c.l.b16 %v1322
        %v1397 = vunpack.c.h.b16 %v1322
        %v1398 = vunpack.c.l.b16 %v1323
        %v1399 = vunpack.c.h.b16 %v1323
        %v1400 = vunpack.c.l.b16 %v1324
        %v1401 = vunpack.c.h.b16 %v1324
        %v1402 = vunpack.c.l.b16 %v1325
        %v1403 = vunpack.c.h.b16 %v1325
        %v1404 = vunpack.c.l.b16 %v1326
        %v1405 = vunpack.c.h.b16 %v1326
        %v1406 = vunpack.c.l.b16 %v1327
        %v1407 = vunpack.c.h.b16 %v1327
        %v1408 = vunpack.c.l.b16 %v1328
        %v1409 = vunpack.c.h.b16 %v1328
        %v1410 = vunpack.c.l.b16 %v1329
        %v1411 = vunpack.c.h.b16 %v1329
        %v1412 = vunpack.c.l.b16 %v1330
        %v1413 = vunpack.c.h.b16 %v1330
        %v1414 = vunpack.c.l.b16 %v1331
        %v1415 = vunpack.c.h.b16 %v1331
        %v1416 = vunpack.c.l.b16 %v1332
        %v1417 = vunpack.c.h.b16 %v1332
        %v1418 = vunpack.c.l.b16 %v1333
        %v1419 = vunpack.c.h.b16 %v1333
        %v1420 = vunpack.c.l.b16 %v1334
        %v1421 = vunpack.c.h.b16 %v1334
        %v1422 = vunpack.c.l.b16 %v1335
        %v1423 = vunpack.c.h.b16 %v1335
        %v1424 = vunpack.c.l.b16 %v1336
        %v1425 = vunpack.c.h.b16 %v1336
        %v1426 = vunpack.c.l.b16 %v1337
        %v1427 = vunpack.c.h.b16 %v1337
        %v1428 = vunpack.c.l.b16 %v1338
        %v1429 = vunpack.c.h.b16 %v1338
        %v1430 = vunpack.c.l.b16 %v1339
        %v1431 = vunpack.c.h.b16 %v1339
        %v1432 = vunpack.c.l.b16 %v1340
        %v1433 = vunpack.c.h.b16 %v1340
        %v1434 = vunpack.c.l.b16 %v1341
        %v1435 = vunpack.c.h.b16 %v1341
        %v1436 = vunpack.c.l.b16 %v1342
        %v1437 = vunpack.c.h.b16 %v1342
        %v1438 = vunpack.c.l.b16 %v1343
        %v1439 = vunpack.c.h.b16 %v1343
        %v1440 = vpack.c.b16 %v1378, %v1376
        %v1441 = vpack.c.b16 %v1379, %v1377
        %v1442 = vpack.c.b16 %v1382, %v1380
        %v1443 = vpack.c.b16 %v1383, %v1381
        %v1444 = vpack.c.b16 %v1386, %v1384
        %v1445 = vpack.c.b16 %v1387, %v1385
        %v1446 = vpack.c.b16 %v1390, %v1388
        %v1447 = vpack.c.b16 %v1391, %v1389
        %v1448 = vpack.c.b16 %v1394, %v1392
        %v1449 = vpack.c.b16 %v1395, %v1393
        %v1450 = vpack.c.b16 %v1398, %v1396
        %v1451 = vpack.c.b16 %v1399, %v1397
        %v1452 = vpack.c.b16 %v1402, %v1400
        %v1453 = vpack.c.b16 %v1403, %v1401
        %v1454 = vpack.c.b16 %v1406, %v1404
        %v1455 = vpack.c.b16 %v1407, %v1405
        %v1456 = vpack.c.b16 %v1410, %v1408
        %v1457 = vpack.c.b16 %v1411, %v1409
        %v1458 = vpack.c.b16 %v1414, %v1412
        %v1459 = vpack.c.b16 %v1415, %v1413
        %v1460 = vpack.c.b16 %v1418, %v1416
        %v1461 = vpack.c.b16 %v1419, %v1417
        %v1462 = vpack.c.b16 %v1422, %v1420
        %v1463 = vpack.c.b16 %v1423, %v1421
        %v1464 = vpack.c.b16 %v1426, %v1424
        %v1465 = vpack.c.b16 %v1427, %v1425
        %v1466 = vpack.c.b16 %v1430, %v1428
        %v1467 = vpack.c.b16 %v1431, %v1429
        %v1468 = vpack.c.b16 %v1434, %v1432
        %v1469 = vpack.c.b16 %v1435, %v1433
        %v1470 = vpack.c.b16 %v1438, %v1436
        %v1471 = vpack.c.b16 %v1439, %v1437
        %1504 = vmatpush.bf16.msra.mxu0 %v1454
        %1505 = vmatpush.bf16.msra.mxu0 %v1452
        %1506 = vmatpush.bf16.msra.mxu0 %v1450
        %1507 = vmatpush.bf16.msra.mxu0 %v1448
        %1508 = vmatpush.bf16.msra.mxu0 %v1446
        %1509 = vmatpush.bf16.msra.mxu0 %v1444
        %1510 = vmatpush.bf16.msra.mxu0 %v1442
        %1511 = vmatpush.bf16.msra.mxu0 %v1440
        %1512 = vmatmul.bf16.gmra.mxu0 %v1304
        %v1513 = vpop.f32.mrf.mxu0
        %v1514 = vadd.f32 0.0, %v1513
        %v1515 = vpop.f32.mrf.mxu0
        %v1516 = vadd.f32 0.0, %v1515
        %1517 = vdwg.mxu0
        %1518 = vmatpush.bf16.msra.mxu0 %v1470
        %1519 = vmatpush.bf16.msra.mxu0 %v1468
        %1520 = vmatpush.bf16.msra.mxu0 %v1466
        %1521 = vmatpush.bf16.msra.mxu0 %v1464
        %1522 = vmatpush.bf16.msra.mxu0 %v1462
        %1523 = vmatpush.bf16.msra.mxu0 %v1460
        %1524 = vmatpush.bf16.msra.mxu0 %v1458
        %1525 = vmatpush.bf16.msra.mxu0 %v1456
        %1526 = vmatmul.bf16.gmra.mxu0 %v1310
        %v1527 = vpop.f32.mrf.mxu0
        %v1528 = vadd.f32 %v1514, %v1527
        %v1529 = vpop.f32.mrf.mxu0
        %v1530 = vadd.f32 %v1516, %v1529
        %1531 = vdwg.mxu0
        %1532 = vmatpush.bf16.msra.mxu0 %v1455
        %1533 = vmatpush.bf16.msra.mxu0 %v1453
        %1534 = vmatpush.bf16.msra.mxu0 %v1451
        %1535 = vmatpush.bf16.msra.mxu0 %v1449
        %1536 = vmatpush.bf16.msra.mxu0 %v1447
        %1537 = vmatpush.bf16.msra.mxu0 %v1445
        %1538 = vmatpush.bf16.msra.mxu0 %v1443
        %1539 = vmatpush.bf16.msra.mxu0 %v1441
        %1540 = vmatmul.bf16.gmra.mxu0 %v1304
        %v1541 = vpop.f32.mrf.mxu0
        %v1542 = vadd.f32 0.0, %v1541
        %v1543 = vpop.f32.mrf.mxu0
        %v1544 = vadd.f32 0.0, %v1543
        %1545 = vdwg.mxu0
        %1546 = vmatpush.bf16.msra.mxu0 %v1471
        %1547 = vmatpush.bf16.msra.mxu0 %v1469
        %1548 = vmatpush.bf16.msra.mxu0 %v1467
        %1549 = vmatpush.bf16.msra.mxu0 %v1465
        %1550 = vmatpush.bf16.msra.mxu0 %v1463
        %1551 = vmatpush.bf16.msra.mxu0 %v1461
        %1552 = vmatpush.bf16.msra.mxu0 %v1459
        %1553 = vmatpush.bf16.msra.mxu0 %v1457
        %1554 = vmatmul.bf16.gmra.mxu0 %v1310
        %v1555 = vpop.f32.mrf.mxu0
        %v1556 = vadd.f32 %v1542, %v1555
        %v1557 = vpop.f32.mrf.mxu0
        %v1558 = vadd.f32 %v1544, %v1557
        %1559 = vdwg.mxu0
        %p1560 = scmp.eq.s32.totalorder %s29, 0
        // Predicated region
        $region57: #{tpu_custom_call.1} parent=39 // pred_check
          %p1561 = pneg %p1560
        $region58: #{tpu_custom_call.1} parent=39 // pred_check_branch
          %1563 = sbr.rel (%p1561) target = $region60
        $region59: #{tpu_custom_call.1} parent=39 // pred_region
          %1564 = vst [vmem:[%s328] sm:$0xff] 0.0
          %1565 = vst [vmem:[%s328 + $0x8] sm:$0xff] 0.0
          %1566 = vst [vmem:[%s328 + $0x10] sm:$0xff] 0.0
          %1567 = vst [vmem:[%s328 + $0x18] sm:$0xff] 0.0
        $region60: #{tpu_custom_call.1} parent=39 // pred_fallthru
          _
        %v1568 = vld [vmem:[%s328] sm:$0xff]
        %v1569 = vld [vmem:[%s328 + $0x8] sm:$0xff]
        %v1570 = vld [vmem:[%s328 + $0x10] sm:$0xff]
        %v1571 = vld [vmem:[%s328 + $0x18] sm:$0xff]
        %v1572 = vadd.f32 %v1568, %v1528
        %v1573 = vadd.f32 %v1569, %v1556
        %v1574 = vadd.f32 %v1570, %v1530
        %v1575 = vadd.f32 %v1571, %v1558
        %1576 = vst [vmem:[%s328] sm:$0xff] %v1572
        %1577 = vst [vmem:[%s328 + $0x8] sm:$0xff] %v1573
        %1578 = vst [vmem:[%s328 + $0x10] sm:$0xff] %v1574
        %1579 = vst [vmem:[%s328 + $0x18] sm:$0xff] %v1575
        // Predicated region
        $region61: #{tpu_custom_call.1} parent=39 // pred_check
          %p1580 = pneg %p1560
        $region62: #{tpu_custom_call.1} parent=39 // pred_check_branch
          %1582 = sbr.rel (%p1580) target = $region64
        $region63: #{tpu_custom_call.1} parent=39 // pred_region
          %v1583 = vld [vmem:[%s328] sm:$0xff]
          %v1584 = vld [vmem:[%s328 + $0x8] sm:$0xff]
          %v1585 = vld [vmem:[%s328 + $0x10] sm:$0xff]
          %v1586 = vld [vmem:[%s328 + $0x18] sm:$0xff]
          %v1587 = vld [vmem:[%s4] sm:$0x3]
          %v1589 = vperm.slane %v1587, 0
          %v1590 = vperm.slane %v1587, 1
          %v1593 = vadd.f32 %v1583, %v1589
          %v1594 = vadd.f32 %v1584, %v1590
          %v1595 = vadd.f32 %v1585, %v1589
          %v1596 = vadd.f32 %v1586, %v1590
          %1597 = vst [vmem:[%s328] sm:$0xff] %v1593
          %1598 = vst [vmem:[%s328 + $0x8] sm:$0xff] %v1594
          %1599 = vst [vmem:[%s328 + $0x10] sm:$0xff] %v1595
          %1600 = vst [vmem:[%s328 + $0x18] sm:$0xff] %v1596
        $region64: #{tpu_custom_call.1} parent=39 // pred_fallthru
          _
        %s1601 = sand.u32 %s169, 1
        %s1602 = scalar_lea.sflag [#allocation4], %s1601
        %s1603 = sand.u32 %s169, 1
        %s1604 = smul.addr %s1603, 32
        %s1605 = scalar_lea.vmem [#allocation10], %s1604
        // Predicated region
        $region65: #{tpu_custom_call.1} parent=39 // pred_check
          %p1606 = pneg %p179
        $region66: #{tpu_custom_call.1} parent=39 // pred_check_branch
          %1608 = sbr.rel (%p1606) target = $region68
        $region67: #{tpu_custom_call.1} parent=39 // pred_region
          %s1609 = smul.u32 2, %s28
          %1611 = vsyncadd %s1602, 0
          %s1612 = smul.addr %s1609, 2
          %s1613 = smul.addr %s1612, 8
          %s1614 = scalar_lea.hbm %s5, %s1613
          %s1615 = sshll.u32 %s1605, 4
          %s1616 = int_to_ptr.vmem [resolvable:$true] %s1615
          %s1617 = sshll.u32 %s1614, 4
          %s1618 = int_to_ptr.hbm [resolvable:$true] %s1617
          %1623 = dma.vmem_to_hbm [thread:$0]  %s1616, 512, %s1618, %s1602, 256, 256, 16
        $region68: #{tpu_custom_call.1} parent=39 // pred_fallthru
          _
      $region40: #{tpu_custom_call.1} parent=5 // pred_fallthru
        _
      %p1624 = scmp.le.s32.totalorder 2, %s19
      // Predicated region
      $region69: #{tpu_custom_call.1} parent=5 // pred_check
        %p1625 = pneg %p1624
      $region70: #{tpu_custom_call.1} parent=5 // pred_check_branch
        %1627 = sbr.rel (%p1625) target = $region72
      $region71: #{tpu_custom_call.1} parent=5 // pred_region
        %s1628 = ssub.s32 %s19, 2
        // Predicated region
        $region73: #{tpu_custom_call.1} parent=71 // pred_check
          %p1629 = pneg %p185
        $region74: #{tpu_custom_call.1} parent=71 // pred_check_branch
          %1631 = sbr.rel (%p1629) target = $region76
        $region75: #{tpu_custom_call.1} parent=71 // pred_region
          %s1632 = sand.u32 %s170, 1
          %s1633 = scalar_lea.sflag [#allocation4], %s1632
          %s1634 = sand.u32 %s170, 1
          %s1635 = smul.addr %s1634, 32
          %s1636 = scalar_lea.vmem [#allocation10], %s1635
          %1638 = dma.done %s1633, 512
        $region76: #{tpu_custom_call.1} parent=71 // pred_fallthru
          _
      $region72: #{tpu_custom_call.1} parent=5 // pred_fallthru
        _
    $region6: #{tpu_custom_call.1} parent=1 // loop_footer
      %s23 = sadd.s32 1, %s19
    $region7: #{tpu_custom_call.1} parent=1 // loop_footer_branch
      %18 = sbr.rel target = $region3
    $region8: #{tpu_custom_call.1} parent=1 // loop_exit
      _
    %1639 = vsyncpa [#allocation3], 1
    %s1640 = scalar_lea.sflag [#allocation3], 1
    %1641 = vsyncpa %s1640, 1
    %1642 = vsyncpa [#allocation6], 1
    %1643 = vsyncpa [#allocation9], 1
    %1644 = vsyncpa [#allocation4], 1
    %s1645 = scalar_lea.sflag [#allocation4], 1
    %1646 = vsyncpa %s1645, 1

</llo_original>
